<compile_context>
chip_gen: v7x
topology: tpu7x:2x2x1
jax: 0.10.0
libtpu: 0.0.40
codegen_flags: <defaults>
</compile_context>

<pallas_src>
import functools

import jax
import jax.numpy as jnp
import numpy as np
from jax.experimental import pallas as pl
from jax.experimental.pallas import tpu as pltpu

# 3x3 taps in (dr, dc) order matching w.reshape(9, Cin, Cout) row-major (kh, kw).
_TAPS9 = tuple((dr, dc) for dr in (-1, 0, 1) for dc in (-1, 0, 1))


def _mod(x, m):
    """x % m for non-negative int32 vectors; bitwise fast path for powers of 2."""
    if m & (m - 1) == 0:
        return jnp.bitwise_and(x, m - 1)
    return x % m   # fallback (not exercised by the test shapes)


# ------------------------------ fused kernel --------------------------------

def _fused_kernel(x_ref, a_ref, wcat_ref, bcat_ref, lb_ref, o_ref,
                  *, H, W, bb, bottle):
    N = H * W
    M = bb * N
    b = bottle
    Din = x_ref.shape[-1]

    # (1) token matmul over the whole image block: h = x @ lora_A -> (M, b).
    h = jnp.dot(x_ref[...].reshape(M, Din), a_ref[...],
                preferred_element_type=jnp.float32)

    # (2) "same"-padding boundary masks built in-register (no mask input, no
    #     padded scratch).  t = block-global token id, p = token id within its
    #     image, c = column.  Row tests only need p (r-1 >= 0 <=> p >= W, etc.)
    #     so no division is required; column tests use p mod W (bitwise AND
    #     when W is a power of two).
    t = jax.lax.broadcasted_iota(jnp.int32, (M, 1), 0)
    p = t if bb == 1 else _mod(t, N)
    c = _mod(t, W)
    row_ok = {-1: p >= W, 1: p < N - W}
    col_ok = {-1: c >= 1, 1: c < W - 1}

    # (3) conv stage: expert1 (3x3) + gate (3x3) + experts 2..4 (exact folded
    #     4-tap convs) batched along Cout into ONE accumulator.  Each tap is a
    #     static XLU roll of h along the token axis, masked at the image
    #     boundary (the roll wrap also lands only on masked positions, so no
    #     halo scratch is needed).
    acc = jnp.zeros((M, 4 * b + 4), jnp.float32)
    for k, (dr, dc) in enumerate(_TAPS9):
        s = dr * W + dc
        tap = h if s == 0 else pltpu.roll(h, (-s) % M, axis=0)
        conds = ([row_ok[dr]] if dr != 0 else []) + ([col_ok[dc]] if dc != 0 else [])
        if conds:
            m = conds[0] if len(conds) == 1 else jnp.logical_and(conds[0], conds[1])
            tap = tap * m.astype(jnp.float32)
        acc = acc + jnp.dot(tap, wcat_ref[k], preferred_element_type=jnp.float32)
    y = acc + bcat_ref[...]

    # (4) gate: relu -> softmax over the 4 expert logits (explicit lane slices,
    #     no cross-lane reduce), then the 4-way mixture.
    g0 = jnp.maximum(y[:, 4 * b + 0:4 * b + 1], 0.0)
    g1 = jnp.maximum(y[:, 4 * b + 1:4 * b + 2], 0.0)
    g2 = jnp.maximum(y[:, 4 * b + 2:4 * b + 3], 0.0)
    g3 = jnp.maximum(y[:, 4 * b + 3:4 * b + 4], 0.0)
    gmax = jnp.maximum(jnp.maximum(g0, g1), jnp.maximum(g2, g3))
    e0 = jnp.exp(g0 - gmax)
    e1 = jnp.exp(g1 - gmax)
    e2 = jnp.exp(g2 - gmax)
    e3 = jnp.exp(g3 - gmax)
    # Exact reciprocal (not approx) to keep the 1e-4 check vs the f32 reference.
    inv = 1.0 / (e0 + e1 + e2 + e3)
    mix = (y[:, 0 * b:1 * b] * (e0 * inv)
           + y[:, 1 * b:2 * b] * (e1 * inv)
           + y[:, 2 * b:3 * b] * (e2 * inv)
           + y[:, 3 * b:4 * b] * (e3 * inv))

    # (5) out = (mix @ lora_B) * (1 / bottle).
    out = jnp.dot(mix, lb_ref[...], preferred_element_type=jnp.float32)
    o_ref[...] = (out * (1.0 / b)).reshape(o_ref.shape).astype(o_ref.dtype)


# ------------------------------ wrapper / prep -------------------------------

def _fold_2x2(w):
    """Fold a 3x3 HWIO kernel into the 4 taps that survive
    nearest-up(s) -> conv3x3(same) -> nearest-down(s) for integer s >= 2
    (floor-indexed 'nearest'): taps (-1,-1), (-1,0), (0,-1), (0,0)."""
    return jnp.stack([w[0, 0],
                      w[0, 1] + w[0, 2],
                      w[1, 0] + w[2, 0],
                      w[1, 1] + w[1, 2] + w[2, 1] + w[2, 2]], axis=0)


def _folded_expert_taps9(w):
    """(3,3,b,Cout) -> (9,b,Cout): folded 4-tap kernel scattered onto the 3x3
    tap positions (-1,-1),(-1,0),(0,-1),(0,0); exact zeros elsewhere."""
    f = _fold_2x2(w)                       # (4, b, Cout)
    z = jnp.zeros_like(f[0])
    return jnp.stack([f[0], f[1], z, f[2], f[3], z, z, z, z], axis=0)


def convlora_forward(x, params, H, W):
    """x: (B, H*W, in_dim) -> (B, H*W, in_dim)."""
    B, N, Din = x.shape
    assert N == H * W
    b = params["lora_A"].shape[1]
    ctot = 4 * b + 4

    # Combined conv rhs / bias; output columns = [ e1 | e2 | e3 | e4 | gate ].
    wcat = jnp.concatenate(
        [params["e1_w"].reshape(9, b, b),
         _folded_expert_taps9(params["e2_w"]),
         _folded_expert_taps9(params["e3_w"]),
         _folded_expert_taps9(params["e4_w"]),
         params["gate_w"].reshape(9, b, 4)], axis=-1)            # (9, b, ctot)
    bcat = jnp.concatenate(
        [params["e1_b"], params["e2_b"], params["e3_b"], params["e4_b"],
         params["gate_b"]]).reshape(1, ctot)

    # Batch folding: bb images per grid step (M = bb*N rows for every matmul),
    # while keeping >= 2 parallel grid steps whenever B is even so both v7x
    # TensorCores get work; on v5e/v6e the grid is just a short serial loop.
    G = 2 if (B >= 2 and B % 2 == 0) else 1
    bb = B // G

    # Explicit VMEM budget (v7x: 64 MiB physical / 32 MiB default scoped).
    # For production SAM shapes (N=4096, Din=768) a token-tiling grid axis
    # with a one-row halo would be needed instead of only raising the limit.
    block_bytes = 4 * (2 * 2 * bb * N * Din            # x + out, double-buffered
                       + 2 * Din * b                   # lora_A, lora_B
                       + 9 * b * ctot + ctot)          # wcat, bcat
    vmem_limit = int(min(max(2 * block_bytes + (4 << 20), 32 << 20), 64 << 20))

    kernel = functools.partial(_fused_kernel, H=H, W=W, bb=bb, bottle=b)
    return pl.pallas_call(
        kernel,
        out_shape=jax.ShapeDtypeStruct((B, N, Din), jnp.float32),
        grid=(G,),
        in_specs=[
            pl.BlockSpec((bb, N, Din), lambda g: (g, 0, 0)),     # x
            pl.BlockSpec((Din, b), lambda g: (0, 0)),            # lora_A
            pl.BlockSpec((9, b, ctot), lambda g: (0, 0, 0)),     # wcat
            pl.BlockSpec((1, ctot), lambda g: (0, 0)),           # bcat
            pl.BlockSpec((b, Din), lambda g: (0, 0)),            # lora_B
        ],
        out_specs=pl.BlockSpec((bb, N, Din), lambda g: (g, 0, 0)),
        compiler_params=pltpu.CompilerParams(
            dimension_semantics=("parallel",),
            vmem_limit_bytes=vmem_limit),
    )(x, params["lora_A"], wcat, bcat, params["lora_B"])


# ------------------------------ pure-JAX reference ---------------------------
# Implements the ORIGINAL module semantics (explicit up/down nearest resize per
# expert) to validate both the fusion and the folded-2x2 rewrite.

def nearest_resize(x, H_n, W_n):
    """F.interpolate(..., mode='nearest') on NHWC: src = floor(dst * in / out)."""
    B, H, W, C = x.shape
    rows = (jnp.arange(H_n) * H) // H_n
    cols = (jnp.arange(W_n) * W) // W_n
    return x[:, rows][:, :, cols]


def ref_forward(x, params, H, W):
    B, N, Din = x.shape
    bottle = params["lora_A"].shape[1]
    h = (x.reshape(B * N, Din) @ params["lora_A"]).reshape(B, H, W, bottle)

    def conv(xin, w, b):
        y = jax.lax.conv_general_dilated(
            xin, w, (1, 1), "SAME",
            dimension_numbers=("NHWC", "HWIO", "NHWC"))
        return y + b

    def expert(xin, w, b, s):
        Hn, Wn = int(H * s), int(W * s)
        y = conv(nearest_resize(xin, Hn, Wn), w, b)
        return nearest_resize(y, H, W)

    x1 = expert(h, params["e1_w"], params["e1_b"], 1.0)
    x2 = expert(h, params["e2_w"], params["e2_b"], 2.0)
    x3 = expert(h, params["e3_w"], params["e3_b"], 3.0)
    x4 = expert(h, params["e4_w"], params["e4_b"], 4.0)
    g = jax.nn.softmax(jax.nn.relu(conv(h, params["gate_w"], params["gate_b"])),
                       axis=-1)
    xc = (x1 * g[..., 0:1] + x2 * g[..., 1:2]
          + x3 * g[..., 2:3] + x4 * g[..., 3:4])
    out = (xc.reshape(B * N, bottle) @ params["lora_B"]) * (1.0 / bottle)
    return out.reshape(B, N, Din)


# ----------------------------------- main ------------------------------------

def make_params(key, in_dim, bottle):
    ks = jax.random.split(key, 12)
    u = lambda k, shape, b: jax.random.uniform(k, shape, jnp.float32, -b, b)
    p = {
        # kaiming_uniform-ish for lora_A (module init).
        "lora_A": u(ks[0], (in_dim, bottle), 1.0 / np.sqrt(bottle)),
        # Module initializes lora_B to zeros (output would be identically 0);
        # use small deterministic random values here for a non-trivial test.
        "lora_B": u(ks[1], (bottle, in_dim), 0.1),
        "gate_w": u(ks[2], (3, 3, bottle, 4), 1.0 / np.sqrt(9 * bottle)),
        "gate_b": u(ks[3], (4,), 1.0 / np.sqrt(9 * bottle)),
    }
    for i, (kw, kb) in enumerate(((ks[4], ks[5]), (ks[6], ks[7]),
                                  (ks[8], ks[9]), (ks[10], ks[11])), start=1):
        p[f"e{i}_w"] = u(kw, (3, 3, bottle, bottle), 1.0 / np.sqrt(9 * bottle))
        p[f"e{i}_b"] = u(kb, (bottle,), 1.0 / np.sqrt(9 * bottle))
    return p


if __name__ == "__main__":
    B, H, W = 2, 8, 8
    in_dim, mlp_ratio = 32, 0.25
    bottle = int(in_dim * mlp_ratio)           # 8
    N = H * W                                  # 64

    key = jax.random.PRNGKey(0)
    kx, kp = jax.random.split(key)
    x = jax.random.normal(kx, (B, N, in_dim), jnp.float32)
    params = make_params(kp, in_dim, bottle)

    fwd = jax.jit(convlora_forward, static_argnums=(2, 3))
    out = jax.block_until_ready(fwd(x, params, H, W))

    ref = jax.block_until_ready(ref_forward(x, params, H, W))
    np.testing.assert_allclose(np.asarray(out), np.asarray(ref),
                               rtol=1e-4, atol=1e-4)
    assert out.shape == (B, N, in_dim) and out.dtype == jnp.float32
    print("KERNEL_OK")
</pallas_src>

<mosaic_0001>
module attributes {stable_mosaic.version = 11 : i64} {
  func.func @_fused_kernel(%arg0: i32, %arg1: memref<1x64x32xf32, #tpu.memory_space<vmem>>, %arg2: memref<32x8xf32, #tpu.memory_space<vmem>>, %arg3: memref<9x8x36xf32, #tpu.memory_space<vmem>>, %arg4: memref<1x36xf32, #tpu.memory_space<vmem>>, %arg5: memref<8x32xf32, #tpu.memory_space<vmem>>, %arg6: memref<1x64x32xf32, #tpu.memory_space<vmem>>) attributes {dimension_semantics = [#tpu.dimension_semantics<parallel>], iteration_bounds = array<i64: 2>, scalar_prefetch = 0 : i64, scratch_operands = 0 : i64, tpu.core_type = #tpu.core_type<tc>, window_params = [{transform_indices = @transform_0, window_bounds = array<i64: 1, 64, 32>}, {pipeline_mode = #tpu.pipeline_mode<synchronous>, transform_indices = @transform_1, window_bounds = array<i64: 32, 8>}, {pipeline_mode = #tpu.pipeline_mode<synchronous>, transform_indices = @transform_2, window_bounds = array<i64: 9, 8, 36>}, {pipeline_mode = #tpu.pipeline_mode<synchronous>, transform_indices = @transform_3, window_bounds = array<i64: 1, 36>}, {pipeline_mode = #tpu.pipeline_mode<synchronous>, transform_indices = @transform_4, window_bounds = array<i64: 8, 32>}, {transform_indices = @transform_5, window_bounds = array<i64: 1, 64, 32>}]} {
    %c0 = arith.constant 0 : index
    %c0_0 = arith.constant 0 : index
    %c0_1 = arith.constant 0 : index
    %0 = vector.load %arg1[%c0, %c0_0, %c0_1] : memref<1x64x32xf32, #tpu.memory_space<vmem>>, vector<1x64x32xf32>
    %1 = vector.shape_cast %0 : vector<1x64x32xf32> to vector<64x32xf32>
    %c0_2 = arith.constant 0 : index
    %c0_3 = arith.constant 0 : index
    %2 = vector.load %arg2[%c0_2, %c0_3] : memref<32x8xf32, #tpu.memory_space<vmem>>, vector<32x8xf32>
    %cst = arith.constant dense<0.000000e+00> : vector<64x8xf32>
    %3 = tpu.matmul %1, %2, %cst {dimension_numbers = #tpu.dot_dimension_numbers<[1], [0], [0], [1], [0, 0, 1, 1], [], []>} : vector<64x32xf32>, vector<32x8xf32>, vector<64x8xf32> -> vector<64x8xf32>
    %4 = tpu.iota {dimensions = array<i32: 0>} : vector<64x1xi32>
    %c7_i32 = arith.constant 7 : i32
    %5 = vector.broadcast %c7_i32 : i32 to vector<64x1xi32>
    %6 = arith.andi %4, %5 : vector<64x1xi32>
    %c8_i32 = arith.constant 8 : i32
    %7 = vector.broadcast %c8_i32 : i32 to vector<64x1xi32>
    %8 = arith.cmpi sge, %4, %7 : vector<64x1xi32>
    %c56_i32 = arith.constant 56 : i32
    %9 = vector.broadcast %c56_i32 : i32 to vector<64x1xi32>
    %10 = arith.cmpi slt, %4, %9 : vector<64x1xi32>
    %c1_i32 = arith.constant 1 : i32
    %11 = vector.broadcast %c1_i32 : i32 to vector<64x1xi32>
    %12 = arith.cmpi sge, %6, %11 : vector<64x1xi32>
    %c7_i32_4 = arith.constant 7 : i32
    %13 = vector.broadcast %c7_i32_4 : i32 to vector<64x1xi32>
    %14 = arith.cmpi slt, %6, %13 : vector<64x1xi32>
    %cst_5 = arith.constant 0.000000e+00 : f32
    %15 = vector.broadcast %cst_5 : f32 to vector<64x36xf32>
    %c9_i32 = arith.constant 9 : i32
    %16 = tpu.dynamic_rotate %3 by %c9_i32 dim 0 : vector<64x8xf32>, i32 -> vector<64x8xf32>
    %17 = arith.andi %8, %12 : vector<64x1xi1>
    %18 = arith.extui %17 : vector<64x1xi1> to vector<64x1xi32>
    %19 = arith.sitofp %18 : vector<64x1xi32> to vector<64x1xf32>
    %20 = vector.broadcast %19 : vector<64x1xf32> to vector<64x8xf32>
    %21 = arith.mulf %16, %20 : vector<64x8xf32>
    %c0_6 = arith.constant 0 : index
    %c0_7 = arith.constant 0 : index
    %c0_8 = arith.constant 0 : index
    %22 = vector.load %arg3[%c0_6, %c0_7, %c0_8] : memref<9x8x36xf32, #tpu.memory_space<vmem>>, vector<1x8x36xf32>
    %23 = vector.shape_cast %22 : vector<1x8x36xf32> to vector<8x36xf32>
    %cst_9 = arith.constant dense<0.000000e+00> : vector<64x36xf32>
    %24 = tpu.matmul %21, %23, %cst_9 {dimension_numbers = #tpu.dot_dimension_numbers<[1], [0], [0], [1], [0, 0, 1, 1], [], []>} : vector<64x8xf32>, vector<8x36xf32>, vector<64x36xf32> -> vector<64x36xf32>
    %25 = arith.addf %15, %24 : vector<64x36xf32>
    %c8_i32_10 = arith.constant 8 : i32
    %26 = tpu.dynamic_rotate %3 by %c8_i32_10 dim 0 : vector<64x8xf32>, i32 -> vector<64x8xf32>
    %27 = arith.extui %8 : vector<64x1xi1> to vector<64x1xi32>
    %28 = arith.sitofp %27 : vector<64x1xi32> to vector<64x1xf32>
    %29 = vector.broadcast %28 : vector<64x1xf32> to vector<64x8xf32>
    %30 = arith.mulf %26, %29 : vector<64x8xf32>
    %c1 = arith.constant 1 : index
    %c0_11 = arith.constant 0 : index
    %c0_12 = arith.constant 0 : index
    %31 = vector.load %arg3[%c1, %c0_11, %c0_12] : memref<9x8x36xf32, #tpu.memory_space<vmem>>, vector<1x8x36xf32>
    %32 = vector.shape_cast %31 : vector<1x8x36xf32> to vector<8x36xf32>
    %cst_13 = arith.constant dense<0.000000e+00> : vector<64x36xf32>
    %33 = tpu.matmul %30, %32, %cst_13 {dimension_numbers = #tpu.dot_dimension_numbers<[1], [0], [0], [1], [0, 0, 1, 1], [], []>} : vector<64x8xf32>, vector<8x36xf32>, vector<64x36xf32> -> vector<64x36xf32>
    %34 = arith.addf %25, %33 : vector<64x36xf32>
    %c7_i32_14 = arith.constant 7 : i32
    %35 = tpu.dynamic_rotate %3 by %c7_i32_14 dim 0 : vector<64x8xf32>, i32 -> vector<64x8xf32>
    %36 = arith.andi %8, %14 : vector<64x1xi1>
    %37 = arith.extui %36 : vector<64x1xi1> to vector<64x1xi32>
    %38 = arith.sitofp %37 : vector<64x1xi32> to vector<64x1xf32>
    %39 = vector.broadcast %38 : vector<64x1xf32> to vector<64x8xf32>
    %40 = arith.mulf %35, %39 : vector<64x8xf32>
    %c2 = arith.constant 2 : index
    %c0_15 = arith.constant 0 : index
    %c0_16 = arith.constant 0 : index
    %41 = vector.load %arg3[%c2, %c0_15, %c0_16] : memref<9x8x36xf32, #tpu.memory_space<vmem>>, vector<1x8x36xf32>
    %42 = vector.shape_cast %41 : vector<1x8x36xf32> to vector<8x36xf32>
    %cst_17 = arith.constant dense<0.000000e+00> : vector<64x36xf32>
    %43 = tpu.matmul %40, %42, %cst_17 {dimension_numbers = #tpu.dot_dimension_numbers<[1], [0], [0], [1], [0, 0, 1, 1], [], []>} : vector<64x8xf32>, vector<8x36xf32>, vector<64x36xf32> -> vector<64x36xf32>
    %44 = arith.addf %34, %43 : vector<64x36xf32>
    %c1_i32_18 = arith.constant 1 : i32
    %45 = tpu.dynamic_rotate %3 by %c1_i32_18 dim 0 : vector<64x8xf32>, i32 -> vector<64x8xf32>
    %46 = arith.extui %12 : vector<64x1xi1> to vector<64x1xi32>
    %47 = arith.sitofp %46 : vector<64x1xi32> to vector<64x1xf32>
    %48 = vector.broadcast %47 : vector<64x1xf32> to vector<64x8xf32>
    %49 = arith.mulf %45, %48 : vector<64x8xf32>
    %c3 = arith.constant 3 : index
    %c0_19 = arith.constant 0 : index
    %c0_20 = arith.constant 0 : index
    %50 = vector.load %arg3[%c3, %c0_19, %c0_20] : memref<9x8x36xf32, #tpu.memory_space<vmem>>, vector<1x8x36xf32>
    %51 = vector.shape_cast %50 : vector<1x8x36xf32> to vector<8x36xf32>
    %cst_21 = arith.constant dense<0.000000e+00> : vector<64x36xf32>
    %52 = tpu.matmul %49, %51, %cst_21 {dimension_numbers = #tpu.dot_dimension_numbers<[1], [0], [0], [1], [0, 0, 1, 1], [], []>} : vector<64x8xf32>, vector<8x36xf32>, vector<64x36xf32> -> vector<64x36xf32>
    %53 = arith.addf %44, %52 : vector<64x36xf32>
    %c4 = arith.constant 4 : index
    %c0_22 = arith.constant 0 : index
    %c0_23 = arith.constant 0 : index
    %54 = vector.load %arg3[%c4, %c0_22, %c0_23] : memref<9x8x36xf32, #tpu.memory_space<vmem>>, vector<1x8x36xf32>
    %55 = vector.shape_cast %54 : vector<1x8x36xf32> to vector<8x36xf32>
    %cst_24 = arith.constant dense<0.000000e+00> : vector<64x36xf32>
    %56 = tpu.matmul %3, %55, %cst_24 {dimension_numbers = #tpu.dot_dimension_numbers<[1], [0], [0], [1], [0, 0, 1, 1], [], []>} : vector<64x8xf32>, vector<8x36xf32>, vector<64x36xf32> -> vector<64x36xf32>
    %57 = arith.addf %53, %56 : vector<64x36xf32>
    %c63_i32 = arith.constant 63 : i32
    %58 = tpu.dynamic_rotate %3 by %c63_i32 dim 0 : vector<64x8xf32>, i32 -> vector<64x8xf32>
    %59 = arith.extui %14 : vector<64x1xi1> to vector<64x1xi32>
    %60 = arith.sitofp %59 : vector<64x1xi32> to vector<64x1xf32>
    %61 = vector.broadcast %60 : vector<64x1xf32> to vector<64x8xf32>
    %62 = arith.mulf %58, %61 : vector<64x8xf32>
    %c5 = arith.constant 5 : index
    %c0_25 = arith.constant 0 : index
    %c0_26 = arith.constant 0 : index
    %63 = vector.load %arg3[%c5, %c0_25, %c0_26] : memref<9x8x36xf32, #tpu.memory_space<vmem>>, vector<1x8x36xf32>
    %64 = vector.shape_cast %63 : vector<1x8x36xf32> to vector<8x36xf32>
    %cst_27 = arith.constant dense<0.000000e+00> : vector<64x36xf32>
    %65 = tpu.matmul %62, %64, %cst_27 {dimension_numbers = #tpu.dot_dimension_numbers<[1], [0], [0], [1], [0, 0, 1, 1], [], []>} : vector<64x8xf32>, vector<8x36xf32>, vector<64x36xf32> -> vector<64x36xf32>
    %66 = arith.addf %57, %65 : vector<64x36xf32>
    %c57_i32 = arith.constant 57 : i32
    %67 = tpu.dynamic_rotate %3 by %c57_i32 dim 0 : vector<64x8xf32>, i32 -> vector<64x8xf32>
    %68 = arith.andi %10, %12 : vector<64x1xi1>
    %69 = arith.extui %68 : vector<64x1xi1> to vector<64x1xi32>
    %70 = arith.sitofp %69 : vector<64x1xi32> to vector<64x1xf32>
    %71 = vector.broadcast %70 : vector<64x1xf32> to vector<64x8xf32>
    %72 = arith.mulf %67, %71 : vector<64x8xf32>
    %c6 = arith.constant 6 : index
    %c0_28 = arith.constant 0 : index
    %c0_29 = arith.constant 0 : index
    %73 = vector.load %arg3[%c6, %c0_28, %c0_29] : memref<9x8x36xf32, #tpu.memory_space<vmem>>, vector<1x8x36xf32>
    %74 = vector.shape_cast %73 : vector<1x8x36xf32> to vector<8x36xf32>
    %cst_30 = arith.constant dense<0.000000e+00> : vector<64x36xf32>
    %75 = tpu.matmul %72, %74, %cst_30 {dimension_numbers = #tpu.dot_dimension_numbers<[1], [0], [0], [1], [0, 0, 1, 1], [], []>} : vector<64x8xf32>, vector<8x36xf32>, vector<64x36xf32> -> vector<64x36xf32>
    %76 = arith.addf %66, %75 : vector<64x36xf32>
    %c56_i32_31 = arith.constant 56 : i32
    %77 = tpu.dynamic_rotate %3 by %c56_i32_31 dim 0 : vector<64x8xf32>, i32 -> vector<64x8xf32>
    %78 = arith.extui %10 : vector<64x1xi1> to vector<64x1xi32>
    %79 = arith.sitofp %78 : vector<64x1xi32> to vector<64x1xf32>
    %80 = vector.broadcast %79 : vector<64x1xf32> to vector<64x8xf32>
    %81 = arith.mulf %77, %80 : vector<64x8xf32>
    %c7 = arith.constant 7 : index
    %c0_32 = arith.constant 0 : index
    %c0_33 = arith.constant 0 : index
    %82 = vector.load %arg3[%c7, %c0_32, %c0_33] : memref<9x8x36xf32, #tpu.memory_space<vmem>>, vector<1x8x36xf32>
    %83 = vector.shape_cast %82 : vector<1x8x36xf32> to vector<8x36xf32>
    %cst_34 = arith.constant dense<0.000000e+00> : vector<64x36xf32>
    %84 = tpu.matmul %81, %83, %cst_34 {dimension_numbers = #tpu.dot_dimension_numbers<[1], [0], [0], [1], [0, 0, 1, 1], [], []>} : vector<64x8xf32>, vector<8x36xf32>, vector<64x36xf32> -> vector<64x36xf32>
    %85 = arith.addf %76, %84 : vector<64x36xf32>
    %c55_i32 = arith.constant 55 : i32
    %86 = tpu.dynamic_rotate %3 by %c55_i32 dim 0 : vector<64x8xf32>, i32 -> vector<64x8xf32>
    %87 = arith.andi %10, %14 : vector<64x1xi1>
    %88 = arith.extui %87 : vector<64x1xi1> to vector<64x1xi32>
    %89 = arith.sitofp %88 : vector<64x1xi32> to vector<64x1xf32>
    %90 = vector.broadcast %89 : vector<64x1xf32> to vector<64x8xf32>
    %91 = arith.mulf %86, %90 : vector<64x8xf32>
    %c8 = arith.constant 8 : index
    %c0_35 = arith.constant 0 : index
    %c0_36 = arith.constant 0 : index
    %92 = vector.load %arg3[%c8, %c0_35, %c0_36] : memref<9x8x36xf32, #tpu.memory_space<vmem>>, vector<1x8x36xf32>
    %93 = vector.shape_cast %92 : vector<1x8x36xf32> to vector<8x36xf32>
    %cst_37 = arith.constant dense<0.000000e+00> : vector<64x36xf32>
    %94 = tpu.matmul %91, %93, %cst_37 {dimension_numbers = #tpu.dot_dimension_numbers<[1], [0], [0], [1], [0, 0, 1, 1], [], []>} : vector<64x8xf32>, vector<8x36xf32>, vector<64x36xf32> -> vector<64x36xf32>
    %95 = arith.addf %85, %94 : vector<64x36xf32>
    %c0_38 = arith.constant 0 : index
    %c0_39 = arith.constant 0 : index
    %96 = vector.load %arg4[%c0_38, %c0_39] : memref<1x36xf32, #tpu.memory_space<vmem>>, vector<1x36xf32>
    %97 = vector.broadcast %96 : vector<1x36xf32> to vector<64x36xf32>
    %98 = arith.addf %95, %97 : vector<64x36xf32>
    %99 = vector.extract_strided_slice %98 {offsets = [0, 32], sizes = [64, 1], strides = [1, 1]} : vector<64x36xf32> to vector<64x1xf32>
    %cst_40 = arith.constant 0.000000e+00 : f32
    %100 = vector.broadcast %cst_40 : f32 to vector<64x1xf32>
    %101 = arith.maximumf %99, %100 : vector<64x1xf32>
    %102 = vector.extract_strided_slice %98 {offsets = [0, 33], sizes = [64, 1], strides = [1, 1]} : vector<64x36xf32> to vector<64x1xf32>
    %cst_41 = arith.constant 0.000000e+00 : f32
    %103 = vector.broadcast %cst_41 : f32 to vector<64x1xf32>
    %104 = arith.maximumf %102, %103 : vector<64x1xf32>
    %105 = vector.extract_strided_slice %98 {offsets = [0, 34], sizes = [64, 1], strides = [1, 1]} : vector<64x36xf32> to vector<64x1xf32>
    %cst_42 = arith.constant 0.000000e+00 : f32
    %106 = vector.broadcast %cst_42 : f32 to vector<64x1xf32>
    %107 = arith.maximumf %105, %106 : vector<64x1xf32>
    %108 = vector.extract_strided_slice %98 {offsets = [0, 35], sizes = [64, 1], strides = [1, 1]} : vector<64x36xf32> to vector<64x1xf32>
    %cst_43 = arith.constant 0.000000e+00 : f32
    %109 = vector.broadcast %cst_43 : f32 to vector<64x1xf32>
    %110 = arith.maximumf %108, %109 : vector<64x1xf32>
    %111 = arith.maximumf %101, %104 : vector<64x1xf32>
    %112 = arith.maximumf %107, %110 : vector<64x1xf32>
    %113 = arith.maximumf %111, %112 : vector<64x1xf32>
    %114 = arith.subf %101, %113 : vector<64x1xf32>
    %115 = math.exp %114 : vector<64x1xf32>
    %116 = arith.subf %104, %113 : vector<64x1xf32>
    %117 = math.exp %116 : vector<64x1xf32>
    %118 = arith.subf %107, %113 : vector<64x1xf32>
    %119 = math.exp %118 : vector<64x1xf32>
    %120 = arith.subf %110, %113 : vector<64x1xf32>
    %121 = math.exp %120 : vector<64x1xf32>
    %122 = arith.addf %115, %117 : vector<64x1xf32>
    %123 = arith.addf %122, %119 : vector<64x1xf32>
    %124 = arith.addf %123, %121 : vector<64x1xf32>
    %cst_44 = arith.constant 1.000000e+00 : f32
    %125 = vector.broadcast %cst_44 : f32 to vector<64x1xf32>
    %126 = arith.divf %125, %124 : vector<64x1xf32>
    %127 = vector.extract_strided_slice %98 {offsets = [0, 0], sizes = [64, 8], strides = [1, 1]} : vector<64x36xf32> to vector<64x8xf32>
    %128 = arith.mulf %115, %126 : vector<64x1xf32>
    %129 = vector.broadcast %128 : vector<64x1xf32> to vector<64x8xf32>
    %130 = arith.mulf %127, %129 : vector<64x8xf32>
    %131 = vector.extract_strided_slice %98 {offsets = [0, 8], sizes = [64, 8], strides = [1, 1]} : vector<64x36xf32> to vector<64x8xf32>
    %132 = arith.mulf %117, %126 : vector<64x1xf32>
    %133 = vector.broadcast %132 : vector<64x1xf32> to vector<64x8xf32>
    %134 = arith.mulf %131, %133 : vector<64x8xf32>
    %135 = arith.addf %130, %134 : vector<64x8xf32>
    %136 = vector.extract_strided_slice %98 {offsets = [0, 16], sizes = [64, 8], strides = [1, 1]} : vector<64x36xf32> to vector<64x8xf32>
    %137 = arith.mulf %119, %126 : vector<64x1xf32>
    %138 = vector.broadcast %137 : vector<64x1xf32> to vector<64x8xf32>
    %139 = arith.mulf %136, %138 : vector<64x8xf32>
    %140 = arith.addf %135, %139 : vector<64x8xf32>
    %141 = vector.extract_strided_slice %98 {offsets = [0, 24], sizes = [64, 8], strides = [1, 1]} : vector<64x36xf32> to vector<64x8xf32>
    %142 = arith.mulf %121, %126 : vector<64x1xf32>
    %143 = vector.broadcast %142 : vector<64x1xf32> to vector<64x8xf32>
    %144 = arith.mulf %141, %143 : vector<64x8xf32>
    %145 = arith.addf %140, %144 : vector<64x8xf32>
    %c0_45 = arith.constant 0 : index
    %c0_46 = arith.constant 0 : index
    %146 = vector.load %arg5[%c0_45, %c0_46] : memref<8x32xf32, #tpu.memory_space<vmem>>, vector<8x32xf32>
    %cst_47 = arith.constant dense<0.000000e+00> : vector<64x32xf32>
    %147 = tpu.matmul %145, %146, %cst_47 {dimension_numbers = #tpu.dot_dimension_numbers<[1], [0], [0], [1], [0, 0, 1, 1], [], []>} : vector<64x8xf32>, vector<8x32xf32>, vector<64x32xf32> -> vector<64x32xf32>
    %cst_48 = arith.constant 1.250000e-01 : f32
    %148 = vector.broadcast %cst_48 : f32 to vector<64x32xf32>
    %149 = arith.mulf %147, %148 : vector<64x32xf32>
    %150 = vector.shape_cast %149 : vector<64x32xf32> to vector<1x64x32xf32>
    %c0_49 = arith.constant 0 : index
    %c0_50 = arith.constant 0 : index
    %c0_51 = arith.constant 0 : index
    %151 = vector.load %arg6[%c0_49, %c0_50, %c0_51] : memref<1x64x32xf32, #tpu.memory_space<vmem>>, vector<1x64x32xf32>
    tpu.vector_store %arg6[%c0_49, %c0_50, %c0_51], %150 {strides = array<i32>} : memref<1x64x32xf32, #tpu.memory_space<vmem>>, vector<1x64x32xf32>,
    return
  }
  func.func @transform_0(%arg0: i32) -> (i32, i32, i32) {
    %c0_i32 = arith.constant 0 : i32
    %c0_i32_0 = arith.constant 0 : i32
    %c0_i32_1 = arith.constant 0 : i32
    return %arg0, %c0_i32, %c0_i32_0 : i32, i32, i32
  }
  func.func @transform_1(%arg0: i32) -> (i32, i32) {
    %c0_i32 = arith.constant 0 : i32
    %c0_i32_0 = arith.constant 0 : i32
    %c0_i32_1 = arith.constant 0 : i32
    return %c0_i32, %c0_i32_0 : i32, i32
  }
  func.func @transform_2(%arg0: i32) -> (i32, i32, i32) {
    %c0_i32 = arith.constant 0 : i32
    %c0_i32_0 = arith.constant 0 : i32
    %c0_i32_1 = arith.constant 0 : i32
    %c0_i32_2 = arith.constant 0 : i32
    return %c0_i32, %c0_i32_0, %c0_i32_1 : i32, i32, i32
  }
  func.func @transform_3(%arg0: i32) -> (i32, i32) {
    %c0_i32 = arith.constant 0 : i32
    %c0_i32_0 = arith.constant 0 : i32
    %c0_i32_1 = arith.constant 0 : i32
    return %c0_i32, %c0_i32_0 : i32, i32
  }
  func.func @transform_4(%arg0: i32) -> (i32, i32) {
    %c0_i32 = arith.constant 0 : i32
    %c0_i32_0 = arith.constant 0 : i32
    %c0_i32_1 = arith.constant 0 : i32
    return %c0_i32, %c0_i32_0 : i32, i32
  }
  func.func @transform_5(%arg0: i32) -> (i32, i32, i32) {
    %c0_i32 = arith.constant 0 : i32
    %c0_i32_0 = arith.constant 0 : i32
    %c0_i32_1 = arith.constant 0 : i32
    return %arg0, %c0_i32, %c0_i32_0 : i32, i32, i32
  }
}

</mosaic_0001>

<llo_original>
// kernel: convlora_forward.1
$region0: #{convlora_forward.1}
  #allocation0 [shape = 'u32[]', space=smem, size = 0x4, offset = 0x4, fixed_abs, tag = 'smem constant byte address 0x4 - core index']
  #allocation1 [shape = 'u32[144,128]{1,0:T(1,128)}', space=vmem, size = 0x12000, scoped, tag = 'internal scratch']
  %s0 = inlined_call_operand.vmem [shape: f32[2,64,32], index: 0, kind: input, shape index: {}]
  %s1 = inlined_call_operand.vmem [shape: f32[32,8], index: 1, kind: input, shape index: {}]
  %s2 = inlined_call_operand.vmem [shape: f32[9,8,36], index: 2, kind: input, shape index: {}]
  %s3 = inlined_call_operand.vmem [shape: f32[1,36], index: 3, kind: input, shape index: {}]
  %s4 = inlined_call_operand.vmem [shape: f32[8,32], index: 4, kind: input, shape index: {}]
  %s5 = inlined_call_operand.vmem [shape: f32[2,64,32], index: 5, kind: output, shape index: {}]
  %s6 = sld [smem:[#allocation0]]
  $region53: #{convlora_forward.1} parent=0
    _
  %s8 = ssub.s32 1, %s6
  %s9 = scalar_select 0, %s8, %s6
  loop: start=0, step=1, limit=4
  $region2: #{convlora_forward.1} parent=0 // loop_pre_header
    _
  $region3: #{convlora_forward.1} parent=0 // loop_header
    %s11 = sphi 0, %s15
    %p12 = scmp.ge.s32.totalorder %s11, 4
    %s21 = sphi 0, %s23
    %s24 = sphi 0, %s21
    %s25 = sphi 0, %s24
    %s41 = sphi 0, %s25
    %s45 = sphi 0, %s45
    %s47 = sphi 0, %s45
    %s48 = sphi 0, %s47
    %s62 = sphi 0, %s48
    %s66 = sphi 0, %s66
    %s68 = sphi 0, %s66
    %s69 = sphi 0, %s68
    %s83 = sphi 0, %s69
    %s87 = sphi 0, %s87
    %s89 = sphi 0, %s87
    %s90 = sphi 0, %s89
    %s104 = sphi 0, %s90
    %s108 = sphi 0, %s108
    %s110 = sphi 0, %s108
    %s111 = sphi 0, %s110
    %s125 = sphi 0, %s111
    %s131 = sphi 0, %s133
    %s134 = sphi 0, %s131
    %s135 = sphi 0, %s134
    %s151 = sphi 0, %s135
  $region4: #{convlora_forward.1} parent=0 // loop_header_branch
    %14 = sbr.rel (%p12) target = $region8
  $region5: #{convlora_forward.1} parent=0 // loop_body
    %s16 = ssub.s32 %s11, 1
    %s17 = ssub.s32 %s11, 2
    %s18 = sadd.s32 %s11, 1
    %s19 = ssub.s32 %s11, %s18
    %p20 = scmp.eq.s32.totalorder %s19, 0
    %s22 = sadd.s32 %s21, 1
    %s23 = scalar_select %p20, %s21, %s22
    %p26 = pneg %p20
    %p27 = scmp.eq.s32.totalorder %s11, 1
    %p28 = por %p26, %p27
    %p29 = scmp.ne.s32.totalorder %s21, %s24
    %p30 = scmp.eq.s32.totalorder %s11, 0
    %p31 = por %p29, %p30
    %p32 = scmp.ne.s32.totalorder %s21, %s24
    %p33 = scmp.eq.s32.totalorder %s16, 1
    %p34 = por %p32, %p33
    %p35 = scmp.ne.s32.totalorder %s24, %s25
    %p36 = scmp.eq.s32.totalorder %s16, 0
    %p37 = por %p35, %p36
    %p38 = scmp.ne.s32.totalorder %s24, %s25
    %p39 = scmp.eq.s32.totalorder %s17, 1
    %p40 = por %p38, %p39
    %p42 = scmp.ne.s32.totalorder %s25, %s41
    %p43 = scmp.eq.s32.totalorder %s17, 0
    %p44 = por %p42, %p43
    %s46 = sadd.s32 %s45, 1
    %p49 = scmp.eq.s32.totalorder %s11, 1
    %p50 = scmp.ne.s32.totalorder %s45, %s47
    %p51 = scmp.eq.s32.totalorder %s11, 0
    %p52 = por %p50, %p51
    %p53 = scmp.ne.s32.totalorder %s45, %s47
    %p54 = scmp.eq.s32.totalorder %s16, 1
    %p55 = por %p53, %p54
    %p56 = scmp.ne.s32.totalorder %s47, %s48
    %p57 = scmp.eq.s32.totalorder %s16, 0
    %p58 = por %p56, %p57
    %p59 = scmp.ne.s32.totalorder %s47, %s48
    %p60 = scmp.eq.s32.totalorder %s17, 1
    %p61 = por %p59, %p60
    %p63 = scmp.ne.s32.totalorder %s48, %s62
    %p64 = scmp.eq.s32.totalorder %s17, 0
    %p65 = por %p63, %p64
    %s67 = sadd.s32 %s66, 1
    %p70 = scmp.eq.s32.totalorder %s11, 1
    %p71 = scmp.ne.s32.totalorder %s66, %s68
    %p72 = scmp.eq.s32.totalorder %s11, 0
    %p73 = por %p71, %p72
    %p74 = scmp.ne.s32.totalorder %s66, %s68
    %p75 = scmp.eq.s32.totalorder %s16, 1
    %p76 = por %p74, %p75
    %p77 = scmp.ne.s32.totalorder %s68, %s69
    %p78 = scmp.eq.s32.totalorder %s16, 0
    %p79 = por %p77, %p78
    %p80 = scmp.ne.s32.totalorder %s68, %s69
    %p81 = scmp.eq.s32.totalorder %s17, 1
    %p82 = por %p80, %p81
    %p84 = scmp.ne.s32.totalorder %s69, %s83
    %p85 = scmp.eq.s32.totalorder %s17, 0
    %p86 = por %p84, %p85
    %s88 = sadd.s32 %s87, 1
    %p91 = scmp.eq.s32.totalorder %s11, 1
    %p92 = scmp.ne.s32.totalorder %s87, %s89
    %p93 = scmp.eq.s32.totalorder %s11, 0
    %p94 = por %p92, %p93
    %p95 = scmp.ne.s32.totalorder %s87, %s89
    %p96 = scmp.eq.s32.totalorder %s16, 1
    %p97 = por %p95, %p96
    %p98 = scmp.ne.s32.totalorder %s89, %s90
    %p99 = scmp.eq.s32.totalorder %s16, 0
    %p100 = por %p98, %p99
    %p101 = scmp.ne.s32.totalorder %s89, %s90
    %p102 = scmp.eq.s32.totalorder %s17, 1
    %p103 = por %p101, %p102
    %p105 = scmp.ne.s32.totalorder %s90, %s104
    %p106 = scmp.eq.s32.totalorder %s17, 0
    %p107 = por %p105, %p106
    %s109 = sadd.s32 %s108, 1
    %p112 = scmp.eq.s32.totalorder %s11, 1
    %p113 = scmp.ne.s32.totalorder %s108, %s110
    %p114 = scmp.eq.s32.totalorder %s11, 0
    %p115 = por %p113, %p114
    %p116 = scmp.ne.s32.totalorder %s108, %s110
    %p117 = scmp.eq.s32.totalorder %s16, 1
    %p118 = por %p116, %p117
    %p119 = scmp.ne.s32.totalorder %s110, %s111
    %p120 = scmp.eq.s32.totalorder %s16, 0
    %p121 = por %p119, %p120
    %p122 = scmp.ne.s32.totalorder %s110, %s111
    %p123 = scmp.eq.s32.totalorder %s17, 1
    %p124 = por %p122, %p123
    %p126 = scmp.ne.s32.totalorder %s111, %s125
    %p127 = scmp.eq.s32.totalorder %s17, 0
    %p128 = por %p126, %p127
    %s129 = ssub.s32 %s11, %s18
    %p130 = scmp.eq.s32.totalorder %s129, 0
    %s132 = sadd.s32 %s131, 1
    %s133 = scalar_select %p130, %s131, %s132
    %p136 = pneg %p130
    %p137 = scmp.eq.s32.totalorder %s11, 1
    %p138 = por %p136, %p137
    %p139 = scmp.ne.s32.totalorder %s131, %s134
    %p140 = scmp.eq.s32.totalorder %s11, 0
    %p141 = por %p139, %p140
    %p142 = scmp.ne.s32.totalorder %s131, %s134
    %p143 = scmp.eq.s32.totalorder %s16, 1
    %p144 = por %p142, %p143
    %p145 = scmp.ne.s32.totalorder %s134, %s135
    %p146 = scmp.eq.s32.totalorder %s16, 0
    %p147 = por %p145, %p146
    %p148 = scmp.ne.s32.totalorder %s134, %s135
    %p149 = scmp.eq.s32.totalorder %s17, 1
    %p150 = por %p148, %p149
    %p152 = scmp.ne.s32.totalorder %s135, %s151
    %p153 = scmp.eq.s32.totalorder %s17, 0
    %p154 = por %p152, %p153
    %p155 = scmp.le.s32.totalorder 1, %s11
    %p156 = scmp.lt.s32.totalorder %s11, 3
    %p157 = pnand %p155, %p156
    %p158 = pneg %p157
    // Predicated region
    $region9: #{convlora_forward.1} parent=5 // pred_check
      _
    $region10: #{convlora_forward.1} parent=5 // pred_check_branch
      %160 = sbr.rel (%p157) target = $region12
    $region11: #{convlora_forward.1} parent=5 // pred_region
      %s161 = ssub.s32 %s11, 1
      // Predicated region
      $region13: #{convlora_forward.1} parent=11 // pred_check
        %p162 = pneg %p58
      $region14: #{convlora_forward.1} parent=11 // pred_check_branch
        %164 = sbr.rel (%p162) target = $region16
      $region15: #{convlora_forward.1} parent=11 // pred_region
        _
      $region16: #{convlora_forward.1} parent=11 // pred_fallthru
        _
      // Predicated region
      $region17: #{convlora_forward.1} parent=11 // pred_check
        %p165 = pneg %p79
      $region18: #{convlora_forward.1} parent=11 // pred_check_branch
        %167 = sbr.rel (%p165) target = $region20
      $region19: #{convlora_forward.1} parent=11 // pred_region
        _
      $region20: #{convlora_forward.1} parent=11 // pred_fallthru
        _
      // Predicated region
      $region21: #{convlora_forward.1} parent=11 // pred_check
        %p168 = pneg %p100
      $region22: #{convlora_forward.1} parent=11 // pred_check_branch
        %170 = sbr.rel (%p168) target = $region24
      $region23: #{convlora_forward.1} parent=11 // pred_region
        _
      $region24: #{convlora_forward.1} parent=11 // pred_fallthru
        _
      // Predicated region
      $region25: #{convlora_forward.1} parent=11 // pred_check
        %p171 = pneg %p121
      $region26: #{convlora_forward.1} parent=11 // pred_check_branch
        %173 = sbr.rel (%p171) target = $region28
      $region27: #{convlora_forward.1} parent=11 // pred_region
        _
      $region28: #{convlora_forward.1} parent=11 // pred_fallthru
        _
    $region12: #{convlora_forward.1} parent=5 // pred_fallthru
      _
    %p174 = scmp.lt.s32.totalorder %s11, 2
    // Predicated region
    $region29: #{convlora_forward.1} parent=5 // pred_check
      %p175 = pneg %p174
    $region30: #{convlora_forward.1} parent=5 // pred_check_branch
      %177 = sbr.rel (%p175) target = $region32
    $region31: #{convlora_forward.1} parent=5 // pred_region
      // Predicated region
      $region33: #{convlora_forward.1} parent=31 // pred_check
        %p178 = pneg %p31
      $region34: #{convlora_forward.1} parent=31 // pred_check_branch
        %180 = sbr.rel (%p178) target = $region36
      $region35: #{convlora_forward.1} parent=31 // pred_region
        %p181 = scmp.lt.s32.totalorder %s11, 1
        %s182 = scalar_select %p181, %s11, 1
        %s183 = smul.addr %s182, 8
        %s184 = smul.addr %s183, 8
        %s185 = scalar_lea.vmem %s0, %s184
      $region36: #{convlora_forward.1} parent=31 // pred_fallthru
        _
    $region32: #{convlora_forward.1} parent=5 // pred_fallthru
      _
    %p186 = scmp.le.s32.totalorder 1, %s11
    %p187 = scmp.lt.s32.totalorder %s11, 3
    %p188 = pnand %p186, %p187
    %p189 = pneg %p188
    // Predicated region
    $region37: #{convlora_forward.1} parent=5 // pred_check
      _
    $region38: #{convlora_forward.1} parent=5 // pred_check_branch
      %191 = sbr.rel (%p188) target = $region40
    $region39: #{convlora_forward.1} parent=5 // pred_region
      %s192 = ssub.s32 %s11, 1
      %p193 = scmp.lt.s32.totalorder %s16, 1
      %s194 = scalar_select %p193, %s16, 1
      %s195 = smul.addr %s194, 8
      %s196 = smul.addr %s195, 8
      %s197 = scalar_lea.vmem %s0, %s196
      %p198 = pneg %p37
      %p199 = pneg %p34
      %p200 = pneg %p58
      %p201 = pneg %p55
      %p202 = pneg %p79
      %p203 = pneg %p76
      %p204 = pneg %p100
      %p205 = pneg %p97
      %p206 = pneg %p121
      %p207 = pneg %p118
      %p208 = pneg %p147
      %p209 = pneg %p144
      %p210 = scmp.lt.s32.totalorder %s16, 1
      %s211 = scalar_select %p210, %s16, 1
      %s212 = smul.addr %s211, 8
      %s213 = smul.addr %s212, 8
      %s214 = scalar_lea.vmem %s5, %s213
      %p215 = scmp.lt.s32.totalorder %s16, 1
      %s216 = scalar_select %p215, %s16, 1
      %s217 = smul.addr %s216, 8
      %s218 = smul.addr %s217, 8
      %s219 = scalar_lea.vmem %s0, %s218
      %p220 = scmp.lt.s32.totalorder %s16, 1
      %s221 = scalar_select %p220, %s16, 1
      %s222 = smul.addr %s221, 8
      %s223 = smul.addr %s222, 8
      %s224 = scalar_lea.vmem %s5, %s223
      %v225 = vld [vmem:[%s219] sm:$0xff]
      %v226 = vld [vmem:[%s219 + $0x8] sm:$0xff]
      %v227 = vld [vmem:[%s219 + $0x10] sm:$0xff]
      %v228 = vld [vmem:[%s219 + $0x18] sm:$0xff]
      %v229 = vld [vmem:[%s219 + $0x20] sm:$0xff]
      %v230 = vld [vmem:[%s219 + $0x28] sm:$0xff]
      %v231 = vld [vmem:[%s219 + $0x30] sm:$0xff]
      %v232 = vld [vmem:[%s219 + $0x38] sm:$0xff]
      %v233 = vld [vmem:[%s1] sm:$0xff]
      %v234 = vld [vmem:[%s1 + $0x8] sm:$0xff]
      %v235 = vld [vmem:[%s1 + $0x10] sm:$0xff]
      %v236 = vld [vmem:[%s1 + $0x18] sm:$0xff]
      %vm237 = vcmask 261120
      %v239 = vsel %vm237, %v225, 0
      %v242 = vsel %vm237, %v226, 0
      %v245 = vsel %vm237, %v227, 0
      %v248 = vsel %vm237, %v228, 0
      %v251 = vsel %vm237, %v229, 0
      %v254 = vsel %vm237, %v230, 0
      %v257 = vsel %vm237, %v231, 0
      %v260 = vsel %vm237, %v232, 0
      %262 = vmatprep.subr.mxu0 0.0
      %263 = vmatpush1.msra.mxu0 %v233
      %264 = vmatprep.subr.mxu0 0.0
      %265 = vmatpush1.msra.mxu0 %v234
      %266 = vmatprep.subr.mxu0 0.0
      %267 = vmatpush1.msra.mxu0 %v235
      %268 = vmatprep.subr.mxu0 0.0
      %269 = vmatpush1.msra.mxu0 %v236
      %270 = vmatprep.subr.mxu0 0.0
      %271 = vmatpush1.msra.mxu0 0.0
      %272 = vmatprep.subr.mxu0 0.0
      %273 = vmatpush1.msra.mxu0 0.0
      %274 = vmatprep.subr.mxu0 0.0
      %275 = vmatpush1.msra.mxu0 0.0
      %276 = vmatprep.subr.mxu0 0.0
      %277 = vmatpush1.msra.mxu0 0.0
      %278 = vmatprep.subr.mxu0 0.0
      %279 = vmatpush1.msra.mxu0 0.0
      %280 = vmatprep.subr.mxu0 0.0
      %281 = vmatpush1.msra.mxu0 0.0
      %282 = vmatprep.subr.mxu0 0.0
      %283 = vmatpush1.msra.mxu0 0.0
      %284 = vmatprep.subr.mxu0 0.0
      %285 = vmatpush1.msra.mxu0 0.0
      %286 = vmatprep.subr.mxu0 0.0
      %287 = vmatpush1.msra.mxu0 0.0
      %288 = vmatprep.subr.mxu0 0.0
      %289 = vmatpush1.msra.mxu0 0.0
      %290 = vmatprep.subr.mxu0 0.0
      %291 = vmatpush1.msra.mxu0 0.0
      %292 = vmatprep.subr.mxu0 0.0
      %293 = vmatpush1.msra.mxu0 0.0
      %294 = vmatprep.subr.mxu0 0.0
      %295 = vmatpush1.msra.mxu0 0.0
      %296 = vmatprep.subr.mxu0 0.0
      %297 = vmatpush1.msra.mxu0 0.0
      %298 = vmatprep.subr.mxu0 0.0
      %299 = vmatpush1.msra.mxu0 0.0
      %300 = vmatprep.subr.mxu0 0.0
      %301 = vmatpush1.msra.mxu0 0.0
      %302 = vmatprep.subr.mxu0 0.0
      %303 = vmatpush1.msra.mxu0 0.0
      %304 = vmatprep.subr.mxu0 0.0
      %305 = vmatpush1.msra.mxu0 0.0
      %306 = vmatprep.subr.mxu0 0.0
      %307 = vmatpush1.msra.mxu0 0.0
      %308 = vmatprep.subr.mxu0 0.0
      %309 = vmatpush1.msra.mxu0 0.0
      %310 = vmatprep.subr.mxu0 0.0
      %311 = vmatpush1.msra.mxu0 0.0
      %312 = vmatprep.subr.mxu0 0.0
      %313 = vmatpush1.msra.mxu0 0.0
      %314 = vmatprep.subr.mxu0 0.0
      %315 = vmatpush1.msra.mxu0 0.0
      %316 = vmatprep.subr.mxu0 0.0
      %317 = vmatpush1.msra.mxu0 0.0
      %318 = vmatprep.subr.mxu0 0.0
      %319 = vmatpush1.msra.mxu0 0.0
      %320 = vmatprep.subr.mxu0 0.0
      %321 = vmatpush1.msra.mxu0 0.0
      %322 = vmatprep.subr.mxu0 0.0
      %323 = vmatpush1.msra.mxu0 0.0
      %324 = vmatprep.subr.mxu0 0.0
      %325 = vmatpush1.msra.mxu0 0.0
      %326 = vmatprep.mubr.f32.mxu0 0.0
      %327 = vmatmul.mubr.f32.gmra.mrb[0].mxu0 %v239
      %v328 = vpop.f32.mrb[0].mxu0
      %v329 = vadd.f32 0.0, %v328
      %v330 = vpop.f32.mrb[0].mxu0
      %331 = vmatprep.mubr.f32.mxu0 0.0
      %332 = vmatmul.mubr.f32.gmra.mrb[0].mxu0 %v242
      %v333 = vpop.f32.mrb[0].mxu0
      %v334 = vadd.f32 0.0, %v333
      %v335 = vpop.f32.mrb[0].mxu0
      %336 = vmatprep.mubr.f32.mxu0 0.0
      %337 = vmatmul.mubr.f32.gmra.mrb[0].mxu0 %v245
      %v338 = vpop.f32.mrb[0].mxu0
      %v339 = vadd.f32 0.0, %v338
      %v340 = vpop.f32.mrb[0].mxu0
      %341 = vmatprep.mubr.f32.mxu0 0.0
      %342 = vmatmul.mubr.f32.gmra.mrb[0].mxu0 %v248
      %v343 = vpop.f32.mrb[0].mxu0
      %v344 = vadd.f32 0.0, %v343
      %v345 = vpop.f32.mrb[0].mxu0
      %346 = vmatprep.mubr.f32.mxu0 0.0
      %347 = vmatmul.mubr.f32.gmra.mrb[0].mxu0 %v251
      %v348 = vpop.f32.mrb[0].mxu0
      %v349 = vadd.f32 0.0, %v348
      %v350 = vpop.f32.mrb[0].mxu0
      %351 = vmatprep.mubr.f32.mxu0 0.0
      %352 = vmatmul.mubr.f32.gmra.mrb[0].mxu0 %v254
      %v353 = vpop.f32.mrb[0].mxu0
      %v354 = vadd.f32 0.0, %v353
      %v355 = vpop.f32.mrb[0].mxu0
      %356 = vmatprep.mubr.f32.mxu0 0.0
      %357 = vmatmul.mubr.f32.gmra.mrb[0].mxu0 %v257
      %v358 = vpop.f32.mrb[0].mxu0
      %v359 = vadd.f32 0.0, %v358
      %v360 = vpop.f32.mrb[0].mxu0
      %361 = vmatprep.mubr.f32.mxu0 0.0
      %362 = vmatmul.mubr.f32.gmra.mrb[0].mxu0 %v260
      %v363 = vpop.f32.mrb[0].mxu0
      %v364 = vadd.f32 0.0, %v363
      %v365 = vpop.f32.mrb[0].mxu0
      %366 = vdwg.mxu0
      %v367 = vlaneseq
      %v368 = vshrl.u32 %v367, 7
      %v369 = vadd.s32 %v368, 8
      %v370 = vadd.s32 %v368, 16
      %v371 = vadd.s32 %v368, 24
      %v372 = vadd.s32 %v368, 32
      %v373 = vadd.s32 %v368, 40
      %v374 = vadd.s32 %v368, 48
      %v375 = vadd.s32 %v368, 56
      %v376 = vand.u32 %v368, 7
      %v377 = vand.u32 %v369, 7
      %v378 = vand.u32 %v370, 7
      %v379 = vand.u32 %v371, 7
      %v380 = vand.u32 %v372, 7
      %v381 = vand.u32 %v373, 7
      %v382 = vand.u32 %v374, 7
      %v383 = vand.u32 %v375, 7
      %vm384 = vcmp.ge.s32.totalorder %v368, 8
      %vm385 = vcmp.ge.s32.totalorder %v369, 8
      %vm386 = vcmp.ge.s32.totalorder %v370, 8
      %vm387 = vcmp.ge.s32.totalorder %v371, 8
      %vm388 = vcmp.ge.s32.totalorder %v372, 8
      %vm389 = vcmp.ge.s32.totalorder %v373, 8
      %vm390 = vcmp.ge.s32.totalorder %v374, 8
      %vm391 = vcmp.ge.s32.totalorder %v375, 8
      %vm392 = vcmp.lt.s32.totalorder %v368, 56
      %vm393 = vcmp.lt.s32.totalorder %v369, 56
      %vm394 = vcmp.lt.s32.totalorder %v370, 56
      %vm395 = vcmp.lt.s32.totalorder %v371, 56
      %vm396 = vcmp.lt.s32.totalorder %v372, 56
      %vm397 = vcmp.lt.s32.totalorder %v373, 56
      %vm398 = vcmp.lt.s32.totalorder %v374, 56
      %vm399 = vcmp.lt.s32.totalorder %v375, 56
      %vm400 = vcmp.ge.s32.totalorder %v376, 1
      %vm401 = vcmp.ge.s32.totalorder %v377, 1
      %vm402 = vcmp.ge.s32.totalorder %v378, 1
      %vm403 = vcmp.ge.s32.totalorder %v379, 1
      %vm404 = vcmp.ge.s32.totalorder %v380, 1
      %vm405 = vcmp.ge.s32.totalorder %v381, 1
      %vm406 = vcmp.ge.s32.totalorder %v382, 1
      %vm407 = vcmp.ge.s32.totalorder %v383, 1
      %vm408 = vcmp.lt.s32.totalorder %v376, 7
      %vm409 = vcmp.lt.s32.totalorder %v377, 7
      %vm410 = vcmp.lt.s32.totalorder %v378, 7
      %vm411 = vcmp.lt.s32.totalorder %v379, 7
      %vm412 = vcmp.lt.s32.totalorder %v380, 7
      %vm413 = vcmp.lt.s32.totalorder %v381, 7
      %vm414 = vcmp.lt.s32.totalorder %v382, 7
      %vm415 = vcmp.lt.s32.totalorder %v383, 7
      %v416 = vrot.slane %v329, 7
      %v417 = vrot.slane %v334, 7
      %v418 = vrot.slane %v339, 7
      %v419 = vrot.slane %v344, 7
      %v420 = vrot.slane %v349, 7
      %v421 = vrot.slane %v354, 7
      %v422 = vrot.slane %v359, 7
      %v423 = vrot.slane %v364, 7
      %vm424 = vcmp.lt.s32.totalorder %v368, 1
      %v425 = vsel %vm424, %v422, %v423
      %v426 = vsel %vm424, %v421, %v422
      %v427 = vsel %vm424, %v420, %v421
      %v428 = vsel %vm424, %v419, %v420
      %v429 = vsel %vm424, %v418, %v419
      %v430 = vsel %vm424, %v417, %v418
      %v431 = vsel %vm424, %v416, %v417
      %v432 = vsel %vm424, %v423, %v416
      %vm433 = vmand %vm384, %vm400
      %vm434 = vmand %vm385, %vm401
      %vm435 = vmand %vm386, %vm402
      %vm436 = vmand %vm387, %vm403
      %vm437 = vmand %vm388, %vm404
      %vm438 = vmand %vm389, %vm405
      %vm439 = vmand %vm390, %vm406
      %vm440 = vmand %vm391, %vm407
      %v441 = vsel %vm433, 1, 0
      %v442 = vsel %vm434, 1, 0
      %v443 = vsel %vm435, 1, 0
      %v444 = vsel %vm436, 1, 0
      %v445 = vsel %vm437, 1, 0
      %v446 = vsel %vm438, 1, 0
      %v447 = vsel %vm439, 1, 0
      %v448 = vsel %vm440, 1, 0
      %v449 = vcvt.s32.f32 %v441
      %v450 = vcvt.s32.f32 %v442
      %v451 = vcvt.s32.f32 %v443
      %v452 = vcvt.s32.f32 %v444
      %v453 = vcvt.s32.f32 %v445
      %v454 = vcvt.s32.f32 %v446
      %v455 = vcvt.s32.f32 %v447
      %v456 = vcvt.s32.f32 %v448
      %v457 = vmul.f32 %v425, %v449
      %v458 = vmul.f32 %v432, %v450
      %v459 = vmul.f32 %v431, %v451
      %v460 = vmul.f32 %v430, %v452
      %v461 = vmul.f32 %v429, %v453
      %v462 = vmul.f32 %v428, %v454
      %v463 = vmul.f32 %v427, %v455
      %v464 = vmul.f32 %v426, %v456
      %v465 = vld [vmem:[%s2] sm:$0xff]
      %v466 = vsel %vm384, 1, 0
      %v467 = vsel %vm385, 1, 0
      %v468 = vsel %vm386, 1, 0
      %v469 = vsel %vm387, 1, 0
      %v470 = vsel %vm388, 1, 0
      %v471 = vsel %vm389, 1, 0
      %v472 = vsel %vm390, 1, 0
      %v473 = vsel %vm391, 1, 0
      %v474 = vcvt.s32.f32 %v466
      %v475 = vcvt.s32.f32 %v467
      %v476 = vcvt.s32.f32 %v468
      %v477 = vcvt.s32.f32 %v469
      %v478 = vcvt.s32.f32 %v470
      %v479 = vcvt.s32.f32 %v471
      %v480 = vcvt.s32.f32 %v472
      %v481 = vcvt.s32.f32 %v473
      %v482 = vmul.f32 %v364, %v474
      %v483 = vmul.f32 %v329, %v475
      %v484 = vmul.f32 %v334, %v476
      %v485 = vmul.f32 %v339, %v477
      %v486 = vmul.f32 %v344, %v478
      %v487 = vmul.f32 %v349, %v479
      %v488 = vmul.f32 %v354, %v480
      %v489 = vmul.f32 %v359, %v481
      %s490 = scalar_lea.vmem %s2, 8
      %v491 = vld [vmem:[%s490] sm:$0xff]
      %vm492 = vcmask 64512
      %v494 = vsel %vm492, %v482, 0
      %v497 = vsel %vm492, %v483, 0
      %v500 = vsel %vm492, %v484, 0
      %v503 = vsel %vm492, %v485, 0
      %v506 = vsel %vm492, %v486, 0
      %v509 = vsel %vm492, %v487, 0
      %v512 = vsel %vm492, %v488, 0
      %v515 = vsel %vm492, %v489, 0
      %517 = vmatprep.subr.mxu0 0.0
      %518 = vmatpush1.msra.mxu0 %v491
      %519 = vmatprep.subr.mxu0 0.0
      %520 = vmatpush1.msra.mxu0 0.0
      %521 = vmatprep.subr.mxu0 0.0
      %522 = vmatpush1.msra.mxu0 0.0
      %523 = vmatprep.subr.mxu0 0.0
      %524 = vmatpush1.msra.mxu0 0.0
      %525 = vmatprep.subr.mxu0 0.0
      %526 = vmatpush1.msra.mxu0 0.0
      %527 = vmatprep.subr.mxu0 0.0
      %528 = vmatpush1.msra.mxu0 0.0
      %529 = vmatprep.subr.mxu0 0.0
      %530 = vmatpush1.msra.mxu0 0.0
      %531 = vmatprep.subr.mxu0 0.0
      %532 = vmatpush1.msra.mxu0 0.0
      %533 = vmatprep.subr.mxu0 0.0
      %534 = vmatpush1.msra.mxu0 0.0
      %535 = vmatprep.subr.mxu0 0.0
      %536 = vmatpush1.msra.mxu0 0.0
      %537 = vmatprep.subr.mxu0 0.0
      %538 = vmatpush1.msra.mxu0 0.0
      %539 = vmatprep.subr.mxu0 0.0
      %540 = vmatpush1.msra.mxu0 0.0
      %541 = vmatprep.subr.mxu0 0.0
      %542 = vmatpush1.msra.mxu0 0.0
      %543 = vmatprep.subr.mxu0 0.0
      %544 = vmatpush1.msra.mxu0 0.0
      %545 = vmatprep.subr.mxu0 0.0
      %546 = vmatpush1.msra.mxu0 0.0
      %547 = vmatprep.subr.mxu0 0.0
      %548 = vmatpush1.msra.mxu0 0.0
      %549 = vmatprep.subr.mxu0 0.0
      %550 = vmatpush1.msra.mxu0 0.0
      %551 = vmatprep.subr.mxu0 0.0
      %552 = vmatpush1.msra.mxu0 0.0
      %553 = vmatprep.subr.mxu0 0.0
      %554 = vmatpush1.msra.mxu0 0.0
      %555 = vmatprep.subr.mxu0 0.0
      %556 = vmatpush1.msra.mxu0 0.0
      %557 = vmatprep.subr.mxu0 0.0
      %558 = vmatpush1.msra.mxu0 0.0
      %559 = vmatprep.subr.mxu0 0.0
      %560 = vmatpush1.msra.mxu0 0.0
      %561 = vmatprep.subr.mxu0 0.0
      %562 = vmatpush1.msra.mxu0 0.0
      %563 = vmatprep.subr.mxu0 0.0
      %564 = vmatpush1.msra.mxu0 0.0
      %565 = vmatprep.subr.mxu0 0.0
      %566 = vmatpush1.msra.mxu0 0.0
      %567 = vmatprep.subr.mxu0 0.0
      %568 = vmatpush1.msra.mxu0 0.0
      %569 = vmatprep.subr.mxu0 0.0
      %570 = vmatpush1.msra.mxu0 0.0
      %571 = vmatprep.subr.mxu0 0.0
      %572 = vmatpush1.msra.mxu0 0.0
      %573 = vmatprep.subr.mxu0 0.0
      %574 = vmatpush1.msra.mxu0 0.0
      %575 = vmatprep.subr.mxu0 0.0
      %576 = vmatpush1.msra.mxu0 0.0
      %577 = vmatprep.subr.mxu0 0.0
      %578 = vmatpush1.msra.mxu0 0.0
      %579 = vmatprep.subr.mxu0 0.0
      %580 = vmatpush1.msra.mxu0 0.0
      %581 = vmatprep.mubr.f32.mxu0 0.0
      %582 = vmatmul.mubr.f32.gmra.mrb[0].mxu0 %v494
      %v583 = vpop.f32.mrb[0].mxu0
      %v584 = vadd.f32 0.0, %v583
      %v585 = vpop.f32.mrb[0].mxu0
      %586 = vmatprep.mubr.f32.mxu0 0.0
      %587 = vmatmul.mubr.f32.gmra.mrb[0].mxu0 %v497
      %v588 = vpop.f32.mrb[0].mxu0
      %v589 = vadd.f32 0.0, %v588
      %v590 = vpop.f32.mrb[0].mxu0
      %591 = vmatprep.mubr.f32.mxu0 0.0
      %592 = vmatmul.mubr.f32.gmra.mrb[0].mxu0 %v500
      %v593 = vpop.f32.mrb[0].mxu0
      %v594 = vadd.f32 0.0, %v593
      %v595 = vpop.f32.mrb[0].mxu0
      %596 = vmatprep.mubr.f32.mxu0 0.0
      %597 = vmatmul.mubr.f32.gmra.mrb[0].mxu0 %v503
      %v598 = vpop.f32.mrb[0].mxu0
      %v599 = vadd.f32 0.0, %v598
      %v600 = vpop.f32.mrb[0].mxu0
      %601 = vmatprep.mubr.f32.mxu0 0.0
      %602 = vmatmul.mubr.f32.gmra.mrb[0].mxu0 %v506
      %v603 = vpop.f32.mrb[0].mxu0
      %v604 = vadd.f32 0.0, %v603
      %v605 = vpop.f32.mrb[0].mxu0
      %606 = vmatprep.mubr.f32.mxu0 0.0
      %607 = vmatmul.mubr.f32.gmra.mrb[0].mxu0 %v509
      %v608 = vpop.f32.mrb[0].mxu0
      %v609 = vadd.f32 0.0, %v608
      %v610 = vpop.f32.mrb[0].mxu0
      %611 = vmatprep.mubr.f32.mxu0 0.0
      %612 = vmatmul.mubr.f32.gmra.mrb[0].mxu0 %v512
      %v613 = vpop.f32.mrb[0].mxu0
      %v614 = vadd.f32 0.0, %v613
      %v615 = vpop.f32.mrb[0].mxu0
      %616 = vmatprep.mubr.f32.mxu0 0.0
      %617 = vmatmul.mubr.f32.gmra.mrb[0].mxu0 %v515
      %v618 = vpop.f32.mrb[0].mxu0
      %v619 = vadd.f32 0.0, %v618
      %v620 = vpop.f32.mrb[0].mxu0
      %621 = vdwg.mxu0
      %v623 = vsel %vm492, %v457, 0
      %v626 = vsel %vm492, %v458, 0
      %v629 = vsel %vm492, %v459, 0
      %v632 = vsel %vm492, %v460, 0
      %v635 = vsel %vm492, %v461, 0
      %v638 = vsel %vm492, %v462, 0
      %v641 = vsel %vm492, %v463, 0
      %v644 = vsel %vm492, %v464, 0
      %646 = vmatprep.subr.mxu0 0.0
      %647 = vmatpush1.msra.mxu0 %v465
      %648 = vmatprep.subr.mxu0 0.0
      %649 = vmatpush1.msra.mxu0 0.0
      %650 = vmatprep.subr.mxu0 0.0
      %651 = vmatpush1.msra.mxu0 0.0
      %652 = vmatprep.subr.mxu0 0.0
      %653 = vmatpush1.msra.mxu0 0.0
      %654 = vmatprep.subr.mxu0 0.0
      %655 = vmatpush1.msra.mxu0 0.0
      %656 = vmatprep.subr.mxu0 0.0
      %657 = vmatpush1.msra.mxu0 0.0
      %658 = vmatprep.subr.mxu0 0.0
      %659 = vmatpush1.msra.mxu0 0.0
      %660 = vmatprep.subr.mxu0 0.0
      %661 = vmatpush1.msra.mxu0 0.0
      %662 = vmatprep.subr.mxu0 0.0
      %663 = vmatpush1.msra.mxu0 0.0
      %664 = vmatprep.subr.mxu0 0.0
      %665 = vmatpush1.msra.mxu0 0.0
      %666 = vmatprep.subr.mxu0 0.0
      %667 = vmatpush1.msra.mxu0 0.0
      %668 = vmatprep.subr.mxu0 0.0
      %669 = vmatpush1.msra.mxu0 0.0
      %670 = vmatprep.subr.mxu0 0.0
      %671 = vmatpush1.msra.mxu0 0.0
      %672 = vmatprep.subr.mxu0 0.0
      %673 = vmatpush1.msra.mxu0 0.0
      %674 = vmatprep.subr.mxu0 0.0
      %675 = vmatpush1.msra.mxu0 0.0
      %676 = vmatprep.subr.mxu0 0.0
      %677 = vmatpush1.msra.mxu0 0.0
      %678 = vmatprep.subr.mxu0 0.0
      %679 = vmatpush1.msra.mxu0 0.0
      %680 = vmatprep.subr.mxu0 0.0
      %681 = vmatpush1.msra.mxu0 0.0
      %682 = vmatprep.subr.mxu0 0.0
      %683 = vmatpush1.msra.mxu0 0.0
      %684 = vmatprep.subr.mxu0 0.0
      %685 = vmatpush1.msra.mxu0 0.0
      %686 = vmatprep.subr.mxu0 0.0
      %687 = vmatpush1.msra.mxu0 0.0
      %688 = vmatprep.subr.mxu0 0.0
      %689 = vmatpush1.msra.mxu0 0.0
      %690 = vmatprep.subr.mxu0 0.0
      %691 = vmatpush1.msra.mxu0 0.0
      %692 = vmatprep.subr.mxu0 0.0
      %693 = vmatpush1.msra.mxu0 0.0
      %694 = vmatprep.subr.mxu0 0.0
      %695 = vmatpush1.msra.mxu0 0.0
      %696 = vmatprep.subr.mxu0 0.0
      %697 = vmatpush1.msra.mxu0 0.0
      %698 = vmatprep.subr.mxu0 0.0
      %699 = vmatpush1.msra.mxu0 0.0
      %700 = vmatprep.subr.mxu0 0.0
      %701 = vmatpush1.msra.mxu0 0.0
      %702 = vmatprep.subr.mxu0 0.0
      %703 = vmatpush1.msra.mxu0 0.0
      %704 = vmatprep.subr.mxu0 0.0
      %705 = vmatpush1.msra.mxu0 0.0
      %706 = vmatprep.subr.mxu0 0.0
      %707 = vmatpush1.msra.mxu0 0.0
      %708 = vmatprep.subr.mxu0 0.0
      %709 = vmatpush1.msra.mxu0 0.0
      %710 = vmatprep.mubr.f32.mxu0 0.0
      %711 = vmatmul.mubr.f32.gmra.mrb[0].mxu0 %v623
      %v712 = vpop.f32.mrb[0].mxu0
      %v713 = vadd.f32 %v584, %v712
      %v714 = vpop.f32.mrb[0].mxu0
      %715 = vmatprep.mubr.f32.mxu0 0.0
      %716 = vmatmul.mubr.f32.gmra.mrb[0].mxu0 %v626
      %v717 = vpop.f32.mrb[0].mxu0
      %v718 = vadd.f32 %v589, %v717
      %v719 = vpop.f32.mrb[0].mxu0
      %720 = vmatprep.mubr.f32.mxu0 0.0
      %721 = vmatmul.mubr.f32.gmra.mrb[0].mxu0 %v629
      %v722 = vpop.f32.mrb[0].mxu0
      %v723 = vadd.f32 %v594, %v722
      %v724 = vpop.f32.mrb[0].mxu0
      %725 = vmatprep.mubr.f32.mxu0 0.0
      %726 = vmatmul.mubr.f32.gmra.mrb[0].mxu0 %v632
      %v727 = vpop.f32.mrb[0].mxu0
      %v728 = vadd.f32 %v599, %v727
      %v729 = vpop.f32.mrb[0].mxu0
      %730 = vmatprep.mubr.f32.mxu0 0.0
      %731 = vmatmul.mubr.f32.gmra.mrb[0].mxu0 %v635
      %v732 = vpop.f32.mrb[0].mxu0
      %v733 = vadd.f32 %v604, %v732
      %v734 = vpop.f32.mrb[0].mxu0
      %735 = vmatprep.mubr.f32.mxu0 0.0
      %736 = vmatmul.mubr.f32.gmra.mrb[0].mxu0 %v638
      %v737 = vpop.f32.mrb[0].mxu0
      %v738 = vadd.f32 %v609, %v737
      %v739 = vpop.f32.mrb[0].mxu0
      %740 = vmatprep.mubr.f32.mxu0 0.0
      %741 = vmatmul.mubr.f32.gmra.mrb[0].mxu0 %v641
      %v742 = vpop.f32.mrb[0].mxu0
      %v743 = vadd.f32 %v614, %v742
      %v744 = vpop.f32.mrb[0].mxu0
      %745 = vmatprep.mubr.f32.mxu0 0.0
      %746 = vmatmul.mubr.f32.gmra.mrb[0].mxu0 %v644
      %v747 = vpop.f32.mrb[0].mxu0
      %v748 = vadd.f32 %v619, %v747
      %v749 = vpop.f32.mrb[0].mxu0
      %750 = vdwg.mxu0
      %v751 = vrot.slane %v329, 1
      %v752 = vrot.slane %v334, 1
      %v753 = vrot.slane %v339, 1
      %v754 = vrot.slane %v344, 1
      %v755 = vrot.slane %v349, 1
      %v756 = vrot.slane %v354, 1
      %v757 = vrot.slane %v359, 1
      %v758 = vrot.slane %v364, 1
      %vm759 = vcmp.lt.s32.totalorder %v368, 7
      %v760 = vsel %vm759, %v757, %v758
      %v761 = vsel %vm759, %v756, %v757
      %v762 = vsel %vm759, %v755, %v756
      %v763 = vsel %vm759, %v754, %v755
      %v764 = vsel %vm759, %v753, %v754
      %v765 = vsel %vm759, %v752, %v753
      %v766 = vsel %vm759, %v751, %v752
      %v767 = vsel %vm759, %v758, %v751
      %vm768 = vmand %vm384, %vm408
      %vm769 = vmand %vm385, %vm409
      %vm770 = vmand %vm386, %vm410
      %vm771 = vmand %vm387, %vm411
      %vm772 = vmand %vm388, %vm412
      %vm773 = vmand %vm389, %vm413
      %vm774 = vmand %vm390, %vm414
      %vm775 = vmand %vm391, %vm415
      %v776 = vsel %vm768, 1, 0
      %v777 = vsel %vm769, 1, 0
      %v778 = vsel %vm770, 1, 0
      %v779 = vsel %vm771, 1, 0
      %v780 = vsel %vm772, 1, 0
      %v781 = vsel %vm773, 1, 0
      %v782 = vsel %vm774, 1, 0
      %v783 = vsel %vm775, 1, 0
      %v784 = vcvt.s32.f32 %v776
      %v785 = vcvt.s32.f32 %v777
      %v786 = vcvt.s32.f32 %v778
      %v787 = vcvt.s32.f32 %v779
      %v788 = vcvt.s32.f32 %v780
      %v789 = vcvt.s32.f32 %v781
      %v790 = vcvt.s32.f32 %v782
      %v791 = vcvt.s32.f32 %v783
      %v792 = vmul.f32 %v767, %v784
      %v793 = vmul.f32 %v766, %v785
      %v794 = vmul.f32 %v765, %v786
      %v795 = vmul.f32 %v764, %v787
      %v796 = vmul.f32 %v763, %v788
      %v797 = vmul.f32 %v762, %v789
      %v798 = vmul.f32 %v761, %v790
      %v799 = vmul.f32 %v760, %v791
      %s800 = scalar_lea.vmem %s2, 16
      %v801 = vld [vmem:[%s800] sm:$0xff]
      %v803 = vsel %vm492, %v792, 0
      %v806 = vsel %vm492, %v793, 0
      %v809 = vsel %vm492, %v794, 0
      %v812 = vsel %vm492, %v795, 0
      %v815 = vsel %vm492, %v796, 0
      %v818 = vsel %vm492, %v797, 0
      %v821 = vsel %vm492, %v798, 0
      %v824 = vsel %vm492, %v799, 0
      %826 = vmatprep.subr.mxu0 0.0
      %827 = vmatpush1.msra.mxu0 %v801
      %828 = vmatprep.subr.mxu0 0.0
      %829 = vmatpush1.msra.mxu0 0.0
      %830 = vmatprep.subr.mxu0 0.0
      %831 = vmatpush1.msra.mxu0 0.0
      %832 = vmatprep.subr.mxu0 0.0
      %833 = vmatpush1.msra.mxu0 0.0
      %834 = vmatprep.subr.mxu0 0.0
      %835 = vmatpush1.msra.mxu0 0.0
      %836 = vmatprep.subr.mxu0 0.0
      %837 = vmatpush1.msra.mxu0 0.0
      %838 = vmatprep.subr.mxu0 0.0
      %839 = vmatpush1.msra.mxu0 0.0
      %840 = vmatprep.subr.mxu0 0.0
      %841 = vmatpush1.msra.mxu0 0.0
      %842 = vmatprep.subr.mxu0 0.0
      %843 = vmatpush1.msra.mxu0 0.0
      %844 = vmatprep.subr.mxu0 0.0
      %845 = vmatpush1.msra.mxu0 0.0
      %846 = vmatprep.subr.mxu0 0.0
      %847 = vmatpush1.msra.mxu0 0.0
      %848 = vmatprep.subr.mxu0 0.0
      %849 = vmatpush1.msra.mxu0 0.0
      %850 = vmatprep.subr.mxu0 0.0
      %851 = vmatpush1.msra.mxu0 0.0
      %852 = vmatprep.subr.mxu0 0.0
      %853 = vmatpush1.msra.mxu0 0.0
      %854 = vmatprep.subr.mxu0 0.0
      %855 = vmatpush1.msra.mxu0 0.0
      %856 = vmatprep.subr.mxu0 0.0
      %857 = vmatpush1.msra.mxu0 0.0
      %858 = vmatprep.subr.mxu0 0.0
      %859 = vmatpush1.msra.mxu0 0.0
      %860 = vmatprep.subr.mxu0 0.0
      %861 = vmatpush1.msra.mxu0 0.0
      %862 = vmatprep.subr.mxu0 0.0
      %863 = vmatpush1.msra.mxu0 0.0
      %864 = vmatprep.subr.mxu0 0.0
      %865 = vmatpush1.msra.mxu0 0.0
      %866 = vmatprep.subr.mxu0 0.0
      %867 = vmatpush1.msra.mxu0 0.0
      %868 = vmatprep.subr.mxu0 0.0
      %869 = vmatpush1.msra.mxu0 0.0
      %870 = vmatprep.subr.mxu0 0.0
      %871 = vmatpush1.msra.mxu0 0.0
      %872 = vmatprep.subr.mxu0 0.0
      %873 = vmatpush1.msra.mxu0 0.0
      %874 = vmatprep.subr.mxu0 0.0
      %875 = vmatpush1.msra.mxu0 0.0
      %876 = vmatprep.subr.mxu0 0.0
      %877 = vmatpush1.msra.mxu0 0.0
      %878 = vmatprep.subr.mxu0 0.0
      %879 = vmatpush1.msra.mxu0 0.0
      %880 = vmatprep.subr.mxu0 0.0
      %881 = vmatpush1.msra.mxu0 0.0
      %882 = vmatprep.subr.mxu0 0.0
      %883 = vmatpush1.msra.mxu0 0.0
      %884 = vmatprep.subr.mxu0 0.0
      %885 = vmatpush1.msra.mxu0 0.0
      %886 = vmatprep.subr.mxu0 0.0
      %887 = vmatpush1.msra.mxu0 0.0
      %888 = vmatprep.subr.mxu0 0.0
      %889 = vmatpush1.msra.mxu0 0.0
      %890 = vmatprep.mubr.f32.mxu0 0.0
      %891 = vmatmul.mubr.f32.gmra.mrb[0].mxu0 %v803
      %v892 = vpop.f32.mrb[0].mxu0
      %v893 = vadd.f32 0.0, %v892
      %v894 = vpop.f32.mrb[0].mxu0
      %895 = vmatprep.mubr.f32.mxu0 0.0
      %896 = vmatmul.mubr.f32.gmra.mrb[0].mxu0 %v806
      %v897 = vpop.f32.mrb[0].mxu0
      %v898 = vadd.f32 0.0, %v897
      %v899 = vpop.f32.mrb[0].mxu0
      %900 = vmatprep.mubr.f32.mxu0 0.0
      %901 = vmatmul.mubr.f32.gmra.mrb[0].mxu0 %v809
      %v902 = vpop.f32.mrb[0].mxu0
      %v903 = vadd.f32 0.0, %v902
      %v904 = vpop.f32.mrb[0].mxu0
      %905 = vmatprep.mubr.f32.mxu0 0.0
      %906 = vmatmul.mubr.f32.gmra.mrb[0].mxu0 %v812
      %v907 = vpop.f32.mrb[0].mxu0
      %v908 = vadd.f32 0.0, %v907
      %v909 = vpop.f32.mrb[0].mxu0
      %910 = vmatprep.mubr.f32.mxu0 0.0
      %911 = vmatmul.mubr.f32.gmra.mrb[0].mxu0 %v815
      %v912 = vpop.f32.mrb[0].mxu0
      %v913 = vadd.f32 0.0, %v912
      %v914 = vpop.f32.mrb[0].mxu0
      %915 = vmatprep.mubr.f32.mxu0 0.0
      %916 = vmatmul.mubr.f32.gmra.mrb[0].mxu0 %v818
      %v917 = vpop.f32.mrb[0].mxu0
      %v918 = vadd.f32 0.0, %v917
      %v919 = vpop.f32.mrb[0].mxu0
      %920 = vmatprep.mubr.f32.mxu0 0.0
      %921 = vmatmul.mubr.f32.gmra.mrb[0].mxu0 %v821
      %v922 = vpop.f32.mrb[0].mxu0
      %v923 = vadd.f32 0.0, %v922
      %v924 = vpop.f32.mrb[0].mxu0
      %925 = vmatprep.mubr.f32.mxu0 0.0
      %926 = vmatmul.mubr.f32.gmra.mrb[0].mxu0 %v824
      %v927 = vpop.f32.mrb[0].mxu0
      %v928 = vadd.f32 0.0, %v927
      %v929 = vpop.f32.mrb[0].mxu0
      %930 = vdwg.mxu0
      %v931 = vadd.f32 %v713, %v893
      %v932 = vadd.f32 %v718, %v898
      %v933 = vadd.f32 %v723, %v903
      %v934 = vadd.f32 %v728, %v908
      %v935 = vadd.f32 %v733, %v913
      %v936 = vadd.f32 %v738, %v918
      %v937 = vadd.f32 %v743, %v923
      %v938 = vadd.f32 %v748, %v928
      %v939 = vsel %vm400, 1, 0
      %v940 = vsel %vm401, 1, 0
      %v941 = vsel %vm402, 1, 0
      %v942 = vsel %vm403, 1, 0
      %v943 = vsel %vm404, 1, 0
      %v944 = vsel %vm405, 1, 0
      %v945 = vsel %vm406, 1, 0
      %v946 = vsel %vm407, 1, 0
      %v947 = vcvt.s32.f32 %v939
      %v948 = vcvt.s32.f32 %v940
      %v949 = vcvt.s32.f32 %v941
      %v950 = vcvt.s32.f32 %v942
      %v951 = vcvt.s32.f32 %v943
      %v952 = vcvt.s32.f32 %v944
      %v953 = vcvt.s32.f32 %v945
      %v954 = vcvt.s32.f32 %v946
      %v955 = vmul.f32 %v432, %v947
      %v956 = vmul.f32 %v431, %v948
      %v957 = vmul.f32 %v430, %v949
      %v958 = vmul.f32 %v429, %v950
      %v959 = vmul.f32 %v428, %v951
      %v960 = vmul.f32 %v427, %v952
      %v961 = vmul.f32 %v426, %v953
      %v962 = vmul.f32 %v425, %v954
      %s963 = scalar_lea.vmem %s2, 24
      %v964 = vld [vmem:[%s963] sm:$0xff]
      %v966 = vsel %vm492, %v955, 0
      %v969 = vsel %vm492, %v956, 0
      %v972 = vsel %vm492, %v957, 0
      %v975 = vsel %vm492, %v958, 0
      %v978 = vsel %vm492, %v959, 0
      %v981 = vsel %vm492, %v960, 0
      %v984 = vsel %vm492, %v961, 0
      %v987 = vsel %vm492, %v962, 0
      %989 = vmatprep.subr.mxu0 0.0
      %990 = vmatpush1.msra.mxu0 %v964
      %991 = vmatprep.subr.mxu0 0.0
      %992 = vmatpush1.msra.mxu0 0.0
      %993 = vmatprep.subr.mxu0 0.0
      %994 = vmatpush1.msra.mxu0 0.0
      %995 = vmatprep.subr.mxu0 0.0
      %996 = vmatpush1.msra.mxu0 0.0
      %997 = vmatprep.subr.mxu0 0.0
      %998 = vmatpush1.msra.mxu0 0.0
      %999 = vmatprep.subr.mxu0 0.0
      %1000 = vmatpush1.msra.mxu0 0.0
      %1001 = vmatprep.subr.mxu0 0.0
      %1002 = vmatpush1.msra.mxu0 0.0
      %1003 = vmatprep.subr.mxu0 0.0
      %1004 = vmatpush1.msra.mxu0 0.0
      %1005 = vmatprep.subr.mxu0 0.0
      %1006 = vmatpush1.msra.mxu0 0.0
      %1007 = vmatprep.subr.mxu0 0.0
      %1008 = vmatpush1.msra.mxu0 0.0
      %1009 = vmatprep.subr.mxu0 0.0
      %1010 = vmatpush1.msra.mxu0 0.0
      %1011 = vmatprep.subr.mxu0 0.0
      %1012 = vmatpush1.msra.mxu0 0.0
      %1013 = vmatprep.subr.mxu0 0.0
      %1014 = vmatpush1.msra.mxu0 0.0
      %1015 = vmatprep.subr.mxu0 0.0
      %1016 = vmatpush1.msra.mxu0 0.0
      %1017 = vmatprep.subr.mxu0 0.0
      %1018 = vmatpush1.msra.mxu0 0.0
      %1019 = vmatprep.subr.mxu0 0.0
      %1020 = vmatpush1.msra.mxu0 0.0
      %1021 = vmatprep.subr.mxu0 0.0
      %1022 = vmatpush1.msra.mxu0 0.0
      %1023 = vmatprep.subr.mxu0 0.0
      %1024 = vmatpush1.msra.mxu0 0.0
      %1025 = vmatprep.subr.mxu0 0.0
      %1026 = vmatpush1.msra.mxu0 0.0
      %1027 = vmatprep.subr.mxu0 0.0
      %1028 = vmatpush1.msra.mxu0 0.0
      %1029 = vmatprep.subr.mxu0 0.0
      %1030 = vmatpush1.msra.mxu0 0.0
      %1031 = vmatprep.subr.mxu0 0.0
      %1032 = vmatpush1.msra.mxu0 0.0
      %1033 = vmatprep.subr.mxu0 0.0
      %1034 = vmatpush1.msra.mxu0 0.0
      %1035 = vmatprep.subr.mxu0 0.0
      %1036 = vmatpush1.msra.mxu0 0.0
      %1037 = vmatprep.subr.mxu0 0.0
      %1038 = vmatpush1.msra.mxu0 0.0
      %1039 = vmatprep.subr.mxu0 0.0
      %1040 = vmatpush1.msra.mxu0 0.0
      %1041 = vmatprep.subr.mxu0 0.0
      %1042 = vmatpush1.msra.mxu0 0.0
      %1043 = vmatprep.subr.mxu0 0.0
      %1044 = vmatpush1.msra.mxu0 0.0
      %1045 = vmatprep.subr.mxu0 0.0
      %1046 = vmatpush1.msra.mxu0 0.0
      %1047 = vmatprep.subr.mxu0 0.0
      %1048 = vmatpush1.msra.mxu0 0.0
      %1049 = vmatprep.subr.mxu0 0.0
      %1050 = vmatpush1.msra.mxu0 0.0
      %1051 = vmatprep.subr.mxu0 0.0
      %1052 = vmatpush1.msra.mxu0 0.0
      %1053 = vmatprep.mubr.f32.mxu0 0.0
      %1054 = vmatmul.mubr.f32.gmra.mrb[0].mxu0 %v966
      %v1055 = vpop.f32.mrb[0].mxu0
      %v1056 = vadd.f32 0.0, %v1055
      %v1057 = vpop.f32.mrb[0].mxu0
      %1058 = vmatprep.mubr.f32.mxu0 0.0
      %1059 = vmatmul.mubr.f32.gmra.mrb[0].mxu0 %v969
      %v1060 = vpop.f32.mrb[0].mxu0
      %v1061 = vadd.f32 0.0, %v1060
      %v1062 = vpop.f32.mrb[0].mxu0
      %1063 = vmatprep.mubr.f32.mxu0 0.0
      %1064 = vmatmul.mubr.f32.gmra.mrb[0].mxu0 %v972
      %v1065 = vpop.f32.mrb[0].mxu0
      %v1066 = vadd.f32 0.0, %v1065
      %v1067 = vpop.f32.mrb[0].mxu0
      %1068 = vmatprep.mubr.f32.mxu0 0.0
      %1069 = vmatmul.mubr.f32.gmra.mrb[0].mxu0 %v975
      %v1070 = vpop.f32.mrb[0].mxu0
      %v1071 = vadd.f32 0.0, %v1070
      %v1072 = vpop.f32.mrb[0].mxu0
      %1073 = vmatprep.mubr.f32.mxu0 0.0
      %1074 = vmatmul.mubr.f32.gmra.mrb[0].mxu0 %v978
      %v1075 = vpop.f32.mrb[0].mxu0
      %v1076 = vadd.f32 0.0, %v1075
      %v1077 = vpop.f32.mrb[0].mxu0
      %1078 = vmatprep.mubr.f32.mxu0 0.0
      %1079 = vmatmul.mubr.f32.gmra.mrb[0].mxu0 %v981
      %v1080 = vpop.f32.mrb[0].mxu0
      %v1081 = vadd.f32 0.0, %v1080
      %v1082 = vpop.f32.mrb[0].mxu0
      %1083 = vmatprep.mubr.f32.mxu0 0.0
      %1084 = vmatmul.mubr.f32.gmra.mrb[0].mxu0 %v984
      %v1085 = vpop.f32.mrb[0].mxu0
      %v1086 = vadd.f32 0.0, %v1085
      %v1087 = vpop.f32.mrb[0].mxu0
      %1088 = vmatprep.mubr.f32.mxu0 0.0
      %1089 = vmatmul.mubr.f32.gmra.mrb[0].mxu0 %v987
      %v1090 = vpop.f32.mrb[0].mxu0
      %v1091 = vadd.f32 0.0, %v1090
      %v1092 = vpop.f32.mrb[0].mxu0
      %1093 = vdwg.mxu0
      %v1094 = vadd.f32 %v931, %v1056
      %v1095 = vadd.f32 %v932, %v1061
      %v1096 = vadd.f32 %v933, %v1066
      %v1097 = vadd.f32 %v934, %v1071
      %v1098 = vadd.f32 %v935, %v1076
      %v1099 = vadd.f32 %v936, %v1081
      %v1100 = vadd.f32 %v937, %v1086
      %v1101 = vadd.f32 %v938, %v1091
      %s1102 = scalar_lea.vmem %s2, 32
      %v1103 = vld [vmem:[%s1102] sm:$0xff]
      %v1105 = vsel %vm492, %v329, 0
      %v1108 = vsel %vm492, %v334, 0
      %v1111 = vsel %vm492, %v339, 0
      %v1114 = vsel %vm492, %v344, 0
      %v1117 = vsel %vm492, %v349, 0
      %v1120 = vsel %vm492, %v354, 0
      %v1123 = vsel %vm492, %v359, 0
      %v1126 = vsel %vm492, %v364, 0
      %1128 = vmatprep.subr.mxu0 0.0
      %1129 = vmatpush1.msra.mxu0 %v1103
      %1130 = vmatprep.subr.mxu0 0.0
      %1131 = vmatpush1.msra.mxu0 0.0
      %1132 = vmatprep.subr.mxu0 0.0
      %1133 = vmatpush1.msra.mxu0 0.0
      %1134 = vmatprep.subr.mxu0 0.0
      %1135 = vmatpush1.msra.mxu0 0.0
      %1136 = vmatprep.subr.mxu0 0.0
      %1137 = vmatpush1.msra.mxu0 0.0
      %1138 = vmatprep.subr.mxu0 0.0
      %1139 = vmatpush1.msra.mxu0 0.0
      %1140 = vmatprep.subr.mxu0 0.0
      %1141 = vmatpush1.msra.mxu0 0.0
      %1142 = vmatprep.subr.mxu0 0.0
      %1143 = vmatpush1.msra.mxu0 0.0
      %1144 = vmatprep.subr.mxu0 0.0
      %1145 = vmatpush1.msra.mxu0 0.0
      %1146 = vmatprep.subr.mxu0 0.0
      %1147 = vmatpush1.msra.mxu0 0.0
      %1148 = vmatprep.subr.mxu0 0.0
      %1149 = vmatpush1.msra.mxu0 0.0
      %1150 = vmatprep.subr.mxu0 0.0
      %1151 = vmatpush1.msra.mxu0 0.0
      %1152 = vmatprep.subr.mxu0 0.0
      %1153 = vmatpush1.msra.mxu0 0.0
      %1154 = vmatprep.subr.mxu0 0.0
      %1155 = vmatpush1.msra.mxu0 0.0
      %1156 = vmatprep.subr.mxu0 0.0
      %1157 = vmatpush1.msra.mxu0 0.0
      %1158 = vmatprep.subr.mxu0 0.0
      %1159 = vmatpush1.msra.mxu0 0.0
      %1160 = vmatprep.subr.mxu0 0.0
      %1161 = vmatpush1.msra.mxu0 0.0
      %1162 = vmatprep.subr.mxu0 0.0
      %1163 = vmatpush1.msra.mxu0 0.0
      %1164 = vmatprep.subr.mxu0 0.0
      %1165 = vmatpush1.msra.mxu0 0.0
      %1166 = vmatprep.subr.mxu0 0.0
      %1167 = vmatpush1.msra.mxu0 0.0
      %1168 = vmatprep.subr.mxu0 0.0
      %1169 = vmatpush1.msra.mxu0 0.0
      %1170 = vmatprep.subr.mxu0 0.0
      %1171 = vmatpush1.msra.mxu0 0.0
      %1172 = vmatprep.subr.mxu0 0.0
      %1173 = vmatpush1.msra.mxu0 0.0
      %1174 = vmatprep.subr.mxu0 0.0
      %1175 = vmatpush1.msra.mxu0 0.0
      %1176 = vmatprep.subr.mxu0 0.0
      %1177 = vmatpush1.msra.mxu0 0.0
      %1178 = vmatprep.subr.mxu0 0.0
      %1179 = vmatpush1.msra.mxu0 0.0
      %1180 = vmatprep.subr.mxu0 0.0
      %1181 = vmatpush1.msra.mxu0 0.0
      %1182 = vmatprep.subr.mxu0 0.0
      %1183 = vmatpush1.msra.mxu0 0.0
      %1184 = vmatprep.subr.mxu0 0.0
      %1185 = vmatpush1.msra.mxu0 0.0
      %1186 = vmatprep.subr.mxu0 0.0
      %1187 = vmatpush1.msra.mxu0 0.0
      %1188 = vmatprep.subr.mxu0 0.0
      %1189 = vmatpush1.msra.mxu0 0.0
      %1190 = vmatprep.subr.mxu0 0.0
      %1191 = vmatpush1.msra.mxu0 0.0
      %1192 = vmatprep.mubr.f32.mxu0 0.0
      %1193 = vmatmul.mubr.f32.gmra.mrb[0].mxu0 %v1105
      %v1194 = vpop.f32.mrb[0].mxu0
      %v1195 = vadd.f32 0.0, %v1194
      %v1196 = vpop.f32.mrb[0].mxu0
      %1197 = vmatprep.mubr.f32.mxu0 0.0
      %1198 = vmatmul.mubr.f32.gmra.mrb[0].mxu0 %v1108
      %v1199 = vpop.f32.mrb[0].mxu0
      %v1200 = vadd.f32 0.0, %v1199
      %v1201 = vpop.f32.mrb[0].mxu0
      %1202 = vmatprep.mubr.f32.mxu0 0.0
      %1203 = vmatmul.mubr.f32.gmra.mrb[0].mxu0 %v1111
      %v1204 = vpop.f32.mrb[0].mxu0
      %v1205 = vadd.f32 0.0, %v1204
      %v1206 = vpop.f32.mrb[0].mxu0
      %1207 = vmatprep.mubr.f32.mxu0 0.0
      %1208 = vmatmul.mubr.f32.gmra.mrb[0].mxu0 %v1114
      %v1209 = vpop.f32.mrb[0].mxu0
      %v1210 = vadd.f32 0.0, %v1209
      %v1211 = vpop.f32.mrb[0].mxu0
      %1212 = vmatprep.mubr.f32.mxu0 0.0
      %1213 = vmatmul.mubr.f32.gmra.mrb[0].mxu0 %v1117
      %v1214 = vpop.f32.mrb[0].mxu0
      %v1215 = vadd.f32 0.0, %v1214
      %v1216 = vpop.f32.mrb[0].mxu0
      %1217 = vmatprep.mubr.f32.mxu0 0.0
      %1218 = vmatmul.mubr.f32.gmra.mrb[0].mxu0 %v1120
      %v1219 = vpop.f32.mrb[0].mxu0
      %v1220 = vadd.f32 0.0, %v1219
      %v1221 = vpop.f32.mrb[0].mxu0
      %1222 = vmatprep.mubr.f32.mxu0 0.0
      %1223 = vmatmul.mubr.f32.gmra.mrb[0].mxu0 %v1123
      %v1224 = vpop.f32.mrb[0].mxu0
      %v1225 = vadd.f32 0.0, %v1224
      %v1226 = vpop.f32.mrb[0].mxu0
      %1227 = vmatprep.mubr.f32.mxu0 0.0
      %1228 = vmatmul.mubr.f32.gmra.mrb[0].mxu0 %v1126
      %v1229 = vpop.f32.mrb[0].mxu0
      %v1230 = vadd.f32 0.0, %v1229
      %v1231 = vpop.f32.mrb[0].mxu0
      %1232 = vdwg.mxu0
      %v1233 = vadd.f32 %v1094, %v1195
      %v1234 = vadd.f32 %v1095, %v1200
      %v1235 = vadd.f32 %v1096, %v1205
      %v1236 = vadd.f32 %v1097, %v1210
      %v1237 = vadd.f32 %v1098, %v1215
      %v1238 = vadd.f32 %v1099, %v1220
      %v1239 = vadd.f32 %v1100, %v1225
      %v1240 = vadd.f32 %v1101, %v1230
      %v1241 = vsel %vm408, 1, 0
      %v1242 = vsel %vm409, 1, 0
      %v1243 = vsel %vm410, 1, 0
      %v1244 = vsel %vm411, 1, 0
      %v1245 = vsel %vm412, 1, 0
      %v1246 = vsel %vm413, 1, 0
      %v1247 = vsel %vm414, 1, 0
      %v1248 = vsel %vm415, 1, 0
      %v1249 = vcvt.s32.f32 %v1241
      %v1250 = vcvt.s32.f32 %v1242
      %v1251 = vcvt.s32.f32 %v1243
      %v1252 = vcvt.s32.f32 %v1244
      %v1253 = vcvt.s32.f32 %v1245
      %v1254 = vcvt.s32.f32 %v1246
      %v1255 = vcvt.s32.f32 %v1247
      %v1256 = vcvt.s32.f32 %v1248
      %v1257 = vmul.f32 %v766, %v1249
      %v1258 = vmul.f32 %v765, %v1250
      %v1259 = vmul.f32 %v764, %v1251
      %v1260 = vmul.f32 %v763, %v1252
      %v1261 = vmul.f32 %v762, %v1253
      %v1262 = vmul.f32 %v761, %v1254
      %v1263 = vmul.f32 %v760, %v1255
      %v1264 = vmul.f32 %v767, %v1256
      %s1265 = scalar_lea.vmem %s2, 40
      %v1266 = vld [vmem:[%s1265] sm:$0xff]
      %v1268 = vsel %vm492, %v1257, 0
      %v1271 = vsel %vm492, %v1258, 0
      %v1274 = vsel %vm492, %v1259, 0
      %v1277 = vsel %vm492, %v1260, 0
      %v1280 = vsel %vm492, %v1261, 0
      %v1283 = vsel %vm492, %v1262, 0
      %v1286 = vsel %vm492, %v1263, 0
      %v1289 = vsel %vm492, %v1264, 0
      %1291 = vmatprep.subr.mxu0 0.0
      %1292 = vmatpush1.msra.mxu0 %v1266
      %1293 = vmatprep.subr.mxu0 0.0
      %1294 = vmatpush1.msra.mxu0 0.0
      %1295 = vmatprep.subr.mxu0 0.0
      %1296 = vmatpush1.msra.mxu0 0.0
      %1297 = vmatprep.subr.mxu0 0.0
      %1298 = vmatpush1.msra.mxu0 0.0
      %1299 = vmatprep.subr.mxu0 0.0
      %1300 = vmatpush1.msra.mxu0 0.0
      %1301 = vmatprep.subr.mxu0 0.0
      %1302 = vmatpush1.msra.mxu0 0.0
      %1303 = vmatprep.subr.mxu0 0.0
      %1304 = vmatpush1.msra.mxu0 0.0
      %1305 = vmatprep.subr.mxu0 0.0
      %1306 = vmatpush1.msra.mxu0 0.0
      %1307 = vmatprep.subr.mxu0 0.0
      %1308 = vmatpush1.msra.mxu0 0.0
      %1309 = vmatprep.subr.mxu0 0.0
      %1310 = vmatpush1.msra.mxu0 0.0
      %1311 = vmatprep.subr.mxu0 0.0
      %1312 = vmatpush1.msra.mxu0 0.0
      %1313 = vmatprep.subr.mxu0 0.0
      %1314 = vmatpush1.msra.mxu0 0.0
      %1315 = vmatprep.subr.mxu0 0.0
      %1316 = vmatpush1.msra.mxu0 0.0
      %1317 = vmatprep.subr.mxu0 0.0
      %1318 = vmatpush1.msra.mxu0 0.0
      %1319 = vmatprep.subr.mxu0 0.0
      %1320 = vmatpush1.msra.mxu0 0.0
      %1321 = vmatprep.subr.mxu0 0.0
      %1322 = vmatpush1.msra.mxu0 0.0
      %1323 = vmatprep.subr.mxu0 0.0
      %1324 = vmatpush1.msra.mxu0 0.0
      %1325 = vmatprep.subr.mxu0 0.0
      %1326 = vmatpush1.msra.mxu0 0.0
      %1327 = vmatprep.subr.mxu0 0.0
      %1328 = vmatpush1.msra.mxu0 0.0
      %1329 = vmatprep.subr.mxu0 0.0
      %1330 = vmatpush1.msra.mxu0 0.0
      %1331 = vmatprep.subr.mxu0 0.0
      %1332 = vmatpush1.msra.mxu0 0.0
      %1333 = vmatprep.subr.mxu0 0.0
      %1334 = vmatpush1.msra.mxu0 0.0
      %1335 = vmatprep.subr.mxu0 0.0
      %1336 = vmatpush1.msra.mxu0 0.0
      %1337 = vmatprep.subr.mxu0 0.0
      %1338 = vmatpush1.msra.mxu0 0.0
      %1339 = vmatprep.subr.mxu0 0.0
      %1340 = vmatpush1.msra.mxu0 0.0
      %1341 = vmatprep.subr.mxu0 0.0
      %1342 = vmatpush1.msra.mxu0 0.0
      %1343 = vmatprep.subr.mxu0 0.0
      %1344 = vmatpush1.msra.mxu0 0.0
      %1345 = vmatprep.subr.mxu0 0.0
      %1346 = vmatpush1.msra.mxu0 0.0
      %1347 = vmatprep.subr.mxu0 0.0
      %1348 = vmatpush1.msra.mxu0 0.0
      %1349 = vmatprep.subr.mxu0 0.0
      %1350 = vmatpush1.msra.mxu0 0.0
      %1351 = vmatprep.subr.mxu0 0.0
      %1352 = vmatpush1.msra.mxu0 0.0
      %1353 = vmatprep.subr.mxu0 0.0
      %1354 = vmatpush1.msra.mxu0 0.0
      %1355 = vmatprep.mubr.f32.mxu0 0.0
      %1356 = vmatmul.mubr.f32.gmra.mrb[0].mxu0 %v1268
      %v1357 = vpop.f32.mrb[0].mxu0
      %v1358 = vadd.f32 0.0, %v1357
      %v1359 = vpop.f32.mrb[0].mxu0
      %1360 = vmatprep.mubr.f32.mxu0 0.0
      %1361 = vmatmul.mubr.f32.gmra.mrb[0].mxu0 %v1271
      %v1362 = vpop.f32.mrb[0].mxu0
      %v1363 = vadd.f32 0.0, %v1362
      %v1364 = vpop.f32.mrb[0].mxu0
      %1365 = vmatprep.mubr.f32.mxu0 0.0
      %1366 = vmatmul.mubr.f32.gmra.mrb[0].mxu0 %v1274
      %v1367 = vpop.f32.mrb[0].mxu0
      %v1368 = vadd.f32 0.0, %v1367
      %v1369 = vpop.f32.mrb[0].mxu0
      %1370 = vmatprep.mubr.f32.mxu0 0.0
      %1371 = vmatmul.mubr.f32.gmra.mrb[0].mxu0 %v1277
      %v1372 = vpop.f32.mrb[0].mxu0
      %v1373 = vadd.f32 0.0, %v1372
      %v1374 = vpop.f32.mrb[0].mxu0
      %1375 = vmatprep.mubr.f32.mxu0 0.0
      %1376 = vmatmul.mubr.f32.gmra.mrb[0].mxu0 %v1280
      %v1377 = vpop.f32.mrb[0].mxu0
      %v1378 = vadd.f32 0.0, %v1377
      %v1379 = vpop.f32.mrb[0].mxu0
      %1380 = vmatprep.mubr.f32.mxu0 0.0
      %1381 = vmatmul.mubr.f32.gmra.mrb[0].mxu0 %v1283
      %v1382 = vpop.f32.mrb[0].mxu0
      %v1383 = vadd.f32 0.0, %v1382
      %v1384 = vpop.f32.mrb[0].mxu0
      %1385 = vmatprep.mubr.f32.mxu0 0.0
      %1386 = vmatmul.mubr.f32.gmra.mrb[0].mxu0 %v1286
      %v1387 = vpop.f32.mrb[0].mxu0
      %v1388 = vadd.f32 0.0, %v1387
      %v1389 = vpop.f32.mrb[0].mxu0
      %1390 = vmatprep.mubr.f32.mxu0 0.0
      %1391 = vmatmul.mubr.f32.gmra.mrb[0].mxu0 %v1289
      %v1392 = vpop.f32.mrb[0].mxu0
      %v1393 = vadd.f32 0.0, %v1392
      %v1394 = vpop.f32.mrb[0].mxu0
      %1395 = vdwg.mxu0
      %v1396 = vadd.f32 %v1233, %v1358
      %v1397 = vadd.f32 %v1234, %v1363
      %v1398 = vadd.f32 %v1235, %v1368
      %v1399 = vadd.f32 %v1236, %v1373
      %v1400 = vadd.f32 %v1237, %v1378
      %v1401 = vadd.f32 %v1238, %v1383
      %v1402 = vadd.f32 %v1239, %v1388
      %v1403 = vadd.f32 %v1240, %v1393
      %vm1404 = vmand %vm392, %vm400
      %vm1405 = vmand %vm393, %vm401
      %vm1406 = vmand %vm394, %vm402
      %vm1407 = vmand %vm395, %vm403
      %vm1408 = vmand %vm396, %vm404
      %vm1409 = vmand %vm397, %vm405
      %vm1410 = vmand %vm398, %vm406
      %vm1411 = vmand %vm399, %vm407
      %v1412 = vsel %vm1404, 1, 0
      %v1413 = vsel %vm1405, 1, 0
      %v1414 = vsel %vm1406, 1, 0
      %v1415 = vsel %vm1407, 1, 0
      %v1416 = vsel %vm1408, 1, 0
      %v1417 = vsel %vm1409, 1, 0
      %v1418 = vsel %vm1410, 1, 0
      %v1419 = vsel %vm1411, 1, 0
      %v1420 = vcvt.s32.f32 %v1412
      %v1421 = vcvt.s32.f32 %v1413
      %v1422 = vcvt.s32.f32 %v1414
      %v1423 = vcvt.s32.f32 %v1415
      %v1424 = vcvt.s32.f32 %v1416
      %v1425 = vcvt.s32.f32 %v1417
      %v1426 = vcvt.s32.f32 %v1418
      %v1427 = vcvt.s32.f32 %v1419
      %v1428 = vmul.f32 %v431, %v1420
      %v1429 = vmul.f32 %v430, %v1421
      %v1430 = vmul.f32 %v429, %v1422
      %v1431 = vmul.f32 %v428, %v1423
      %v1432 = vmul.f32 %v427, %v1424
      %v1433 = vmul.f32 %v426, %v1425
      %v1434 = vmul.f32 %v425, %v1426
      %v1435 = vmul.f32 %v432, %v1427
      %s1436 = scalar_lea.vmem %s2, 48
      %v1437 = vld [vmem:[%s1436] sm:$0xff]
      %v1439 = vsel %vm492, %v1428, 0
      %v1442 = vsel %vm492, %v1429, 0
      %v1445 = vsel %vm492, %v1430, 0
      %v1448 = vsel %vm492, %v1431, 0
      %v1451 = vsel %vm492, %v1432, 0
      %v1454 = vsel %vm492, %v1433, 0
      %v1457 = vsel %vm492, %v1434, 0
      %v1460 = vsel %vm492, %v1435, 0
      %1462 = vmatprep.subr.mxu0 0.0
      %1463 = vmatpush1.msra.mxu0 %v1437
      %1464 = vmatprep.subr.mxu0 0.0
      %1465 = vmatpush1.msra.mxu0 0.0
      %1466 = vmatprep.subr.mxu0 0.0
      %1467 = vmatpush1.msra.mxu0 0.0
      %1468 = vmatprep.subr.mxu0 0.0
      %1469 = vmatpush1.msra.mxu0 0.0
      %1470 = vmatprep.subr.mxu0 0.0
      %1471 = vmatpush1.msra.mxu0 0.0
      %1472 = vmatprep.subr.mxu0 0.0
      %1473 = vmatpush1.msra.mxu0 0.0
      %1474 = vmatprep.subr.mxu0 0.0
      %1475 = vmatpush1.msra.mxu0 0.0
      %1476 = vmatprep.subr.mxu0 0.0
      %1477 = vmatpush1.msra.mxu0 0.0
      %1478 = vmatprep.subr.mxu0 0.0
      %1479 = vmatpush1.msra.mxu0 0.0
      %1480 = vmatprep.subr.mxu0 0.0
      %1481 = vmatpush1.msra.mxu0 0.0
      %1482 = vmatprep.subr.mxu0 0.0
      %1483 = vmatpush1.msra.mxu0 0.0
      %1484 = vmatprep.subr.mxu0 0.0
      %1485 = vmatpush1.msra.mxu0 0.0
      %1486 = vmatprep.subr.mxu0 0.0
      %1487 = vmatpush1.msra.mxu0 0.0
      %1488 = vmatprep.subr.mxu0 0.0
      %1489 = vmatpush1.msra.mxu0 0.0
      %1490 = vmatprep.subr.mxu0 0.0
      %1491 = vmatpush1.msra.mxu0 0.0
      %1492 = vmatprep.subr.mxu0 0.0
      %1493 = vmatpush1.msra.mxu0 0.0
      %1494 = vmatprep.subr.mxu0 0.0
      %1495 = vmatpush1.msra.mxu0 0.0
      %1496 = vmatprep.subr.mxu0 0.0
      %1497 = vmatpush1.msra.mxu0 0.0
      %1498 = vmatprep.subr.mxu0 0.0
      %1499 = vmatpush1.msra.mxu0 0.0
      %1500 = vmatprep.subr.mxu0 0.0
      %1501 = vmatpush1.msra.mxu0 0.0
      %1502 = vmatprep.subr.mxu0 0.0
      %1503 = vmatpush1.msra.mxu0 0.0
      %1504 = vmatprep.subr.mxu0 0.0
      %1505 = vmatpush1.msra.mxu0 0.0
      %1506 = vmatprep.subr.mxu0 0.0
      %1507 = vmatpush1.msra.mxu0 0.0
      %1508 = vmatprep.subr.mxu0 0.0
      %1509 = vmatpush1.msra.mxu0 0.0
      %1510 = vmatprep.subr.mxu0 0.0
      %1511 = vmatpush1.msra.mxu0 0.0
      %1512 = vmatprep.subr.mxu0 0.0
      %1513 = vmatpush1.msra.mxu0 0.0
      %1514 = vmatprep.subr.mxu0 0.0
      %1515 = vmatpush1.msra.mxu0 0.0
      %1516 = vmatprep.subr.mxu0 0.0
      %1517 = vmatpush1.msra.mxu0 0.0
      %1518 = vmatprep.subr.mxu0 0.0
      %1519 = vmatpush1.msra.mxu0 0.0
      %1520 = vmatprep.subr.mxu0 0.0
      %1521 = vmatpush1.msra.mxu0 0.0
      %1522 = vmatprep.subr.mxu0 0.0
      %1523 = vmatpush1.msra.mxu0 0.0
      %1524 = vmatprep.subr.mxu0 0.0
      %1525 = vmatpush1.msra.mxu0 0.0
      %1526 = vmatprep.mubr.f32.mxu0 0.0
      %1527 = vmatmul.mubr.f32.gmra.mrb[0].mxu0 %v1439
      %v1528 = vpop.f32.mrb[0].mxu0
      %v1529 = vadd.f32 0.0, %v1528
      %v1530 = vpop.f32.mrb[0].mxu0
      %1531 = vmatprep.mubr.f32.mxu0 0.0
      %1532 = vmatmul.mubr.f32.gmra.mrb[0].mxu0 %v1442
      %v1533 = vpop.f32.mrb[0].mxu0
      %v1534 = vadd.f32 0.0, %v1533
      %v1535 = vpop.f32.mrb[0].mxu0
      %1536 = vmatprep.mubr.f32.mxu0 0.0
      %1537 = vmatmul.mubr.f32.gmra.mrb[0].mxu0 %v1445
      %v1538 = vpop.f32.mrb[0].mxu0
      %v1539 = vadd.f32 0.0, %v1538
      %v1540 = vpop.f32.mrb[0].mxu0
      %1541 = vmatprep.mubr.f32.mxu0 0.0
      %1542 = vmatmul.mubr.f32.gmra.mrb[0].mxu0 %v1448
      %v1543 = vpop.f32.mrb[0].mxu0
      %v1544 = vadd.f32 0.0, %v1543
      %v1545 = vpop.f32.mrb[0].mxu0
      %1546 = vmatprep.mubr.f32.mxu0 0.0
      %1547 = vmatmul.mubr.f32.gmra.mrb[0].mxu0 %v1451
      %v1548 = vpop.f32.mrb[0].mxu0
      %v1549 = vadd.f32 0.0, %v1548
      %v1550 = vpop.f32.mrb[0].mxu0
      %1551 = vmatprep.mubr.f32.mxu0 0.0
      %1552 = vmatmul.mubr.f32.gmra.mrb[0].mxu0 %v1454
      %v1553 = vpop.f32.mrb[0].mxu0
      %v1554 = vadd.f32 0.0, %v1553
      %v1555 = vpop.f32.mrb[0].mxu0
      %1556 = vmatprep.mubr.f32.mxu0 0.0
      %1557 = vmatmul.mubr.f32.gmra.mrb[0].mxu0 %v1457
      %v1558 = vpop.f32.mrb[0].mxu0
      %v1559 = vadd.f32 0.0, %v1558
      %v1560 = vpop.f32.mrb[0].mxu0
      %1561 = vmatprep.mubr.f32.mxu0 0.0
      %1562 = vmatmul.mubr.f32.gmra.mrb[0].mxu0 %v1460
      %v1563 = vpop.f32.mrb[0].mxu0
      %v1564 = vadd.f32 0.0, %v1563
      %v1565 = vpop.f32.mrb[0].mxu0
      %1566 = vdwg.mxu0
      %v1567 = vadd.f32 %v1396, %v1529
      %v1568 = vadd.f32 %v1397, %v1534
      %v1569 = vadd.f32 %v1398, %v1539
      %v1570 = vadd.f32 %v1399, %v1544
      %v1571 = vadd.f32 %v1400, %v1549
      %v1572 = vadd.f32 %v1401, %v1554
      %v1573 = vadd.f32 %v1402, %v1559
      %v1574 = vadd.f32 %v1403, %v1564
      %v1575 = vsel %vm392, 1, 0
      %v1576 = vsel %vm393, 1, 0
      %v1577 = vsel %vm394, 1, 0
      %v1578 = vsel %vm395, 1, 0
      %v1579 = vsel %vm396, 1, 0
      %v1580 = vsel %vm397, 1, 0
      %v1581 = vsel %vm398, 1, 0
      %v1582 = vsel %vm399, 1, 0
      %v1583 = vcvt.s32.f32 %v1575
      %v1584 = vcvt.s32.f32 %v1576
      %v1585 = vcvt.s32.f32 %v1577
      %v1586 = vcvt.s32.f32 %v1578
      %v1587 = vcvt.s32.f32 %v1579
      %v1588 = vcvt.s32.f32 %v1580
      %v1589 = vcvt.s32.f32 %v1581
      %v1590 = vcvt.s32.f32 %v1582
      %v1591 = vmul.f32 %v334, %v1583
      %v1592 = vmul.f32 %v339, %v1584
      %v1593 = vmul.f32 %v344, %v1585
      %v1594 = vmul.f32 %v349, %v1586
      %v1595 = vmul.f32 %v354, %v1587
      %v1596 = vmul.f32 %v359, %v1588
      %v1597 = vmul.f32 %v364, %v1589
      %v1598 = vmul.f32 %v329, %v1590
      %s1599 = scalar_lea.vmem %s2, 56
      %v1600 = vld [vmem:[%s1599] sm:$0xff]
      %v1602 = vsel %vm492, %v1591, 0
      %v1605 = vsel %vm492, %v1592, 0
      %v1608 = vsel %vm492, %v1593, 0
      %v1611 = vsel %vm492, %v1594, 0
      %v1614 = vsel %vm492, %v1595, 0
      %v1617 = vsel %vm492, %v1596, 0
      %v1620 = vsel %vm492, %v1597, 0
      %v1623 = vsel %vm492, %v1598, 0
      %1625 = vmatprep.subr.mxu0 0.0
      %1626 = vmatpush1.msra.mxu0 %v1600
      %1627 = vmatprep.subr.mxu0 0.0
      %1628 = vmatpush1.msra.mxu0 0.0
      %1629 = vmatprep.subr.mxu0 0.0
      %1630 = vmatpush1.msra.mxu0 0.0
      %1631 = vmatprep.subr.mxu0 0.0
      %1632 = vmatpush1.msra.mxu0 0.0
      %1633 = vmatprep.subr.mxu0 0.0
      %1634 = vmatpush1.msra.mxu0 0.0
      %1635 = vmatprep.subr.mxu0 0.0
      %1636 = vmatpush1.msra.mxu0 0.0
      %1637 = vmatprep.subr.mxu0 0.0
      %1638 = vmatpush1.msra.mxu0 0.0
      %1639 = vmatprep.subr.mxu0 0.0
      %1640 = vmatpush1.msra.mxu0 0.0
      %1641 = vmatprep.subr.mxu0 0.0
      %1642 = vmatpush1.msra.mxu0 0.0
      %1643 = vmatprep.subr.mxu0 0.0
      %1644 = vmatpush1.msra.mxu0 0.0
      %1645 = vmatprep.subr.mxu0 0.0
      %1646 = vmatpush1.msra.mxu0 0.0
      %1647 = vmatprep.subr.mxu0 0.0
      %1648 = vmatpush1.msra.mxu0 0.0
      %1649 = vmatprep.subr.mxu0 0.0
      %1650 = vmatpush1.msra.mxu0 0.0
      %1651 = vmatprep.subr.mxu0 0.0
      %1652 = vmatpush1.msra.mxu0 0.0
      %1653 = vmatprep.subr.mxu0 0.0
      %1654 = vmatpush1.msra.mxu0 0.0
      %1655 = vmatprep.subr.mxu0 0.0
      %1656 = vmatpush1.msra.mxu0 0.0
      %1657 = vmatprep.subr.mxu0 0.0
      %1658 = vmatpush1.msra.mxu0 0.0
      %1659 = vmatprep.subr.mxu0 0.0
      %1660 = vmatpush1.msra.mxu0 0.0
      %1661 = vmatprep.subr.mxu0 0.0
      %1662 = vmatpush1.msra.mxu0 0.0
      %1663 = vmatprep.subr.mxu0 0.0
      %1664 = vmatpush1.msra.mxu0 0.0
      %1665 = vmatprep.subr.mxu0 0.0
      %1666 = vmatpush1.msra.mxu0 0.0
      %1667 = vmatprep.subr.mxu0 0.0
      %1668 = vmatpush1.msra.mxu0 0.0
      %1669 = vmatprep.subr.mxu0 0.0
      %1670 = vmatpush1.msra.mxu0 0.0
      %1671 = vmatprep.subr.mxu0 0.0
      %1672 = vmatpush1.msra.mxu0 0.0
      %1673 = vmatprep.subr.mxu0 0.0
      %1674 = vmatpush1.msra.mxu0 0.0
      %1675 = vmatprep.subr.mxu0 0.0
      %1676 = vmatpush1.msra.mxu0 0.0
      %1677 = vmatprep.subr.mxu0 0.0
      %1678 = vmatpush1.msra.mxu0 0.0
      %1679 = vmatprep.subr.mxu0 0.0
      %1680 = vmatpush1.msra.mxu0 0.0
      %1681 = vmatprep.subr.mxu0 0.0
      %1682 = vmatpush1.msra.mxu0 0.0
      %1683 = vmatprep.subr.mxu0 0.0
      %1684 = vmatpush1.msra.mxu0 0.0
      %1685 = vmatprep.subr.mxu0 0.0
      %1686 = vmatpush1.msra.mxu0 0.0
      %1687 = vmatprep.subr.mxu0 0.0
      %1688 = vmatpush1.msra.mxu0 0.0
      %1689 = vmatprep.mubr.f32.mxu0 0.0
      %1690 = vmatmul.mubr.f32.gmra.mrb[0].mxu0 %v1602
      %v1691 = vpop.f32.mrb[0].mxu0
      %v1692 = vadd.f32 0.0, %v1691
      %v1693 = vpop.f32.mrb[0].mxu0
      %1694 = vmatprep.mubr.f32.mxu0 0.0
      %1695 = vmatmul.mubr.f32.gmra.mrb[0].mxu0 %v1605
      %v1696 = vpop.f32.mrb[0].mxu0
      %v1697 = vadd.f32 0.0, %v1696
      %v1698 = vpop.f32.mrb[0].mxu0
      %1699 = vmatprep.mubr.f32.mxu0 0.0
      %1700 = vmatmul.mubr.f32.gmra.mrb[0].mxu0 %v1608
      %v1701 = vpop.f32.mrb[0].mxu0
      %v1702 = vadd.f32 0.0, %v1701
      %v1703 = vpop.f32.mrb[0].mxu0
      %1704 = vmatprep.mubr.f32.mxu0 0.0
      %1705 = vmatmul.mubr.f32.gmra.mrb[0].mxu0 %v1611
      %v1706 = vpop.f32.mrb[0].mxu0
      %v1707 = vadd.f32 0.0, %v1706
      %v1708 = vpop.f32.mrb[0].mxu0
      %1709 = vmatprep.mubr.f32.mxu0 0.0
      %1710 = vmatmul.mubr.f32.gmra.mrb[0].mxu0 %v1614
      %v1711 = vpop.f32.mrb[0].mxu0
      %v1712 = vadd.f32 0.0, %v1711
      %v1713 = vpop.f32.mrb[0].mxu0
      %1714 = vmatprep.mubr.f32.mxu0 0.0
      %1715 = vmatmul.mubr.f32.gmra.mrb[0].mxu0 %v1617
      %v1716 = vpop.f32.mrb[0].mxu0
      %v1717 = vadd.f32 0.0, %v1716
      %v1718 = vpop.f32.mrb[0].mxu0
      %1719 = vmatprep.mubr.f32.mxu0 0.0
      %1720 = vmatmul.mubr.f32.gmra.mrb[0].mxu0 %v1620
      %v1721 = vpop.f32.mrb[0].mxu0
      %v1722 = vadd.f32 0.0, %v1721
      %v1723 = vpop.f32.mrb[0].mxu0
      %1724 = vmatprep.mubr.f32.mxu0 0.0
      %1725 = vmatmul.mubr.f32.gmra.mrb[0].mxu0 %v1623
      %v1726 = vpop.f32.mrb[0].mxu0
      %v1727 = vadd.f32 0.0, %v1726
      %v1728 = vpop.f32.mrb[0].mxu0
      %1729 = vdwg.mxu0
      %v1730 = vadd.f32 %v1567, %v1692
      %v1731 = vadd.f32 %v1568, %v1697
      %v1732 = vadd.f32 %v1569, %v1702
      %v1733 = vadd.f32 %v1570, %v1707
      %v1734 = vadd.f32 %v1571, %v1712
      %v1735 = vadd.f32 %v1572, %v1717
      %v1736 = vadd.f32 %v1573, %v1722
      %v1737 = vadd.f32 %v1574, %v1727
      %vm1738 = vmand %vm392, %vm408
      %vm1739 = vmand %vm393, %vm409
      %vm1740 = vmand %vm394, %vm410
      %vm1741 = vmand %vm395, %vm411
      %vm1742 = vmand %vm396, %vm412
      %vm1743 = vmand %vm397, %vm413
      %vm1744 = vmand %vm398, %vm414
      %vm1745 = vmand %vm399, %vm415
      %v1746 = vsel %vm1738, 1, 0
      %v1747 = vsel %vm1739, 1, 0
      %v1748 = vsel %vm1740, 1, 0
      %v1749 = vsel %vm1741, 1, 0
      %v1750 = vsel %vm1742, 1, 0
      %v1751 = vsel %vm1743, 1, 0
      %v1752 = vsel %vm1744, 1, 0
      %v1753 = vsel %vm1745, 1, 0
      %v1754 = vcvt.s32.f32 %v1746
      %v1755 = vcvt.s32.f32 %v1747
      %v1756 = vcvt.s32.f32 %v1748
      %v1757 = vcvt.s32.f32 %v1749
      %v1758 = vcvt.s32.f32 %v1750
      %v1759 = vcvt.s32.f32 %v1751
      %v1760 = vcvt.s32.f32 %v1752
      %v1761 = vcvt.s32.f32 %v1753
      %v1762 = vmul.f32 %v765, %v1754
      %v1763 = vmul.f32 %v764, %v1755
      %v1764 = vmul.f32 %v763, %v1756
      %v1765 = vmul.f32 %v762, %v1757
      %v1766 = vmul.f32 %v761, %v1758
      %v1767 = vmul.f32 %v760, %v1759
      %v1768 = vmul.f32 %v767, %v1760
      %v1769 = vmul.f32 %v766, %v1761
      %s1770 = scalar_lea.vmem %s2, 64
      %v1771 = vld [vmem:[%s1770] sm:$0xff]
      %v1773 = vsel %vm492, %v1762, 0
      %v1776 = vsel %vm492, %v1763, 0
      %v1779 = vsel %vm492, %v1764, 0
      %v1782 = vsel %vm492, %v1765, 0
      %v1785 = vsel %vm492, %v1766, 0
      %v1788 = vsel %vm492, %v1767, 0
      %v1791 = vsel %vm492, %v1768, 0
      %v1794 = vsel %vm492, %v1769, 0
      %1796 = vmatprep.subr.mxu0 0.0
      %1797 = vmatpush1.msra.mxu0 %v1771
      %1798 = vmatprep.subr.mxu0 0.0
      %1799 = vmatpush1.msra.mxu0 0.0
      %1800 = vmatprep.subr.mxu0 0.0
      %1801 = vmatpush1.msra.mxu0 0.0
      %1802 = vmatprep.subr.mxu0 0.0
      %1803 = vmatpush1.msra.mxu0 0.0
      %1804 = vmatprep.subr.mxu0 0.0
      %1805 = vmatpush1.msra.mxu0 0.0
      %1806 = vmatprep.subr.mxu0 0.0
      %1807 = vmatpush1.msra.mxu0 0.0
      %1808 = vmatprep.subr.mxu0 0.0
      %1809 = vmatpush1.msra.mxu0 0.0
      %1810 = vmatprep.subr.mxu0 0.0
      %1811 = vmatpush1.msra.mxu0 0.0
      %1812 = vmatprep.subr.mxu0 0.0
      %1813 = vmatpush1.msra.mxu0 0.0
      %1814 = vmatprep.subr.mxu0 0.0
      %1815 = vmatpush1.msra.mxu0 0.0
      %1816 = vmatprep.subr.mxu0 0.0
      %1817 = vmatpush1.msra.mxu0 0.0
      %1818 = vmatprep.subr.mxu0 0.0
      %1819 = vmatpush1.msra.mxu0 0.0
      %1820 = vmatprep.subr.mxu0 0.0
      %1821 = vmatpush1.msra.mxu0 0.0
      %1822 = vmatprep.subr.mxu0 0.0
      %1823 = vmatpush1.msra.mxu0 0.0
      %1824 = vmatprep.subr.mxu0 0.0
      %1825 = vmatpush1.msra.mxu0 0.0
      %1826 = vmatprep.subr.mxu0 0.0
      %1827 = vmatpush1.msra.mxu0 0.0
      %1828 = vmatprep.subr.mxu0 0.0
      %1829 = vmatpush1.msra.mxu0 0.0
      %1830 = vmatprep.subr.mxu0 0.0
      %1831 = vmatpush1.msra.mxu0 0.0
      %1832 = vmatprep.subr.mxu0 0.0
      %1833 = vmatpush1.msra.mxu0 0.0
      %1834 = vmatprep.subr.mxu0 0.0
      %1835 = vmatpush1.msra.mxu0 0.0
      %1836 = vmatprep.subr.mxu0 0.0
      %1837 = vmatpush1.msra.mxu0 0.0
      %1838 = vmatprep.subr.mxu0 0.0
      %1839 = vmatpush1.msra.mxu0 0.0
      %1840 = vmatprep.subr.mxu0 0.0
      %1841 = vmatpush1.msra.mxu0 0.0
      %1842 = vmatprep.subr.mxu0 0.0
      %1843 = vmatpush1.msra.mxu0 0.0
      %1844 = vmatprep.subr.mxu0 0.0
      %1845 = vmatpush1.msra.mxu0 0.0
      %1846 = vmatprep.subr.mxu0 0.0
      %1847 = vmatpush1.msra.mxu0 0.0
      %1848 = vmatprep.subr.mxu0 0.0
      %1849 = vmatpush1.msra.mxu0 0.0
      %1850 = vmatprep.subr.mxu0 0.0
      %1851 = vmatpush1.msra.mxu0 0.0
      %1852 = vmatprep.subr.mxu0 0.0
      %1853 = vmatpush1.msra.mxu0 0.0
      %1854 = vmatprep.subr.mxu0 0.0
      %1855 = vmatpush1.msra.mxu0 0.0
      %1856 = vmatprep.subr.mxu0 0.0
      %1857 = vmatpush1.msra.mxu0 0.0
      %1858 = vmatprep.subr.mxu0 0.0
      %1859 = vmatpush1.msra.mxu0 0.0
      %1860 = vmatprep.mubr.f32.mxu0 0.0
      %1861 = vmatmul.mubr.f32.gmra.mrb[0].mxu0 %v1773
      %v1862 = vpop.f32.mrb[0].mxu0
      %v1863 = vadd.f32 0.0, %v1862
      %v1864 = vpop.f32.mrb[0].mxu0
      %1865 = vmatprep.mubr.f32.mxu0 0.0
      %1866 = vmatmul.mubr.f32.gmra.mrb[0].mxu0 %v1776
      %v1867 = vpop.f32.mrb[0].mxu0
      %v1868 = vadd.f32 0.0, %v1867
      %v1869 = vpop.f32.mrb[0].mxu0
      %1870 = vmatprep.mubr.f32.mxu0 0.0
      %1871 = vmatmul.mubr.f32.gmra.mrb[0].mxu0 %v1779
      %v1872 = vpop.f32.mrb[0].mxu0
      %v1873 = vadd.f32 0.0, %v1872
      %v1874 = vpop.f32.mrb[0].mxu0
      %1875 = vmatprep.mubr.f32.mxu0 0.0
      %1876 = vmatmul.mubr.f32.gmra.mrb[0].mxu0 %v1782
      %v1877 = vpop.f32.mrb[0].mxu0
      %v1878 = vadd.f32 0.0, %v1877
      %v1879 = vpop.f32.mrb[0].mxu0
      %1880 = vmatprep.mubr.f32.mxu0 0.0
      %1881 = vmatmul.mubr.f32.gmra.mrb[0].mxu0 %v1785
      %v1882 = vpop.f32.mrb[0].mxu0
      %v1883 = vadd.f32 0.0, %v1882
      %v1884 = vpop.f32.mrb[0].mxu0
      %1885 = vmatprep.mubr.f32.mxu0 0.0
      %1886 = vmatmul.mubr.f32.gmra.mrb[0].mxu0 %v1788
      %v1887 = vpop.f32.mrb[0].mxu0
      %v1888 = vadd.f32 0.0, %v1887
      %v1889 = vpop.f32.mrb[0].mxu0
      %1890 = vmatprep.mubr.f32.mxu0 0.0
      %1891 = vmatmul.mubr.f32.gmra.mrb[0].mxu0 %v1791
      %v1892 = vpop.f32.mrb[0].mxu0
      %v1893 = vadd.f32 0.0, %v1892
      %v1894 = vpop.f32.mrb[0].mxu0
      %1895 = vmatprep.mubr.f32.mxu0 0.0
      %1896 = vmatmul.mubr.f32.gmra.mrb[0].mxu0 %v1794
      %v1897 = vpop.f32.mrb[0].mxu0
      %v1898 = vadd.f32 0.0, %v1897
      %v1899 = vpop.f32.mrb[0].mxu0
      %1900 = vdwg.mxu0
      %v1901 = vadd.f32 %v1730, %v1863
      %v1902 = vadd.f32 %v1731, %v1868
      %v1903 = vadd.f32 %v1732, %v1873
      %v1904 = vadd.f32 %v1733, %v1878
      %v1905 = vadd.f32 %v1734, %v1883
      %v1906 = vadd.f32 %v1735, %v1888
      %v1907 = vadd.f32 %v1736, %v1893
      %v1908 = vadd.f32 %v1737, %v1898
      %v1909 = vld [vmem:[%s3] sm:$0x1]
      %v1911 = vlaneseq
      %v1912 = vshrl.u32 %v1911, 7
      %v1913 = vsub.s32 0, %v1912
      %v1914 = vrot.slane %v1909, %v1913
      %v1916 = vadd.f32 %v1901, %v1914
      %v1917 = vadd.f32 %v1902, %v1914
      %v1918 = vadd.f32 %v1903, %v1914
      %v1919 = vadd.f32 %v1904, %v1914
      %v1920 = vadd.f32 %v1905, %v1914
      %v1921 = vadd.f32 %v1906, %v1914
      %v1922 = vadd.f32 %v1907, %v1914
      %v1923 = vadd.f32 %v1908, %v1914
      %v1924 = vmax.f32 %v1916, 0.0
      %v1925 = vmax.f32 %v1917, 0.0
      %v1926 = vmax.f32 %v1918, 0.0
      %v1927 = vmax.f32 %v1919, 0.0
      %v1928 = vmax.f32 %v1920, 0.0
      %v1929 = vmax.f32 %v1921, 0.0
      %v1930 = vmax.f32 %v1922, 0.0
      %v1931 = vmax.f32 %v1923, 0.0
      %1940 = vrot.lane.b32.xlu0 %v1924, 127
      %v1941 = vpop.permute.xlu0 %1940
      %1942 = vrot.lane.b32.xlu0 %v1925, 127
      %v1943 = vpop.permute.xlu0 %1942
      %1944 = vrot.lane.b32.xlu0 %v1926, 127
      %v1945 = vpop.permute.xlu0 %1944
      %1946 = vrot.lane.b32.xlu0 %v1927, 127
      %v1947 = vpop.permute.xlu0 %1946
      %1948 = vrot.lane.b32.xlu0 %v1928, 127
      %v1949 = vpop.permute.xlu0 %1948
      %1950 = vrot.lane.b32.xlu0 %v1929, 127
      %v1951 = vpop.permute.xlu0 %1950
      %1952 = vrot.lane.b32.xlu0 %v1930, 127
      %v1953 = vpop.permute.xlu0 %1952
      %1954 = vrot.lane.b32.xlu0 %v1931, 127
      %v1955 = vpop.permute.xlu0 %1954
      %v1964 = vmax.f32 %v1924, %v1941
      %v1965 = vmax.f32 %v1925, %v1943
      %v1966 = vmax.f32 %v1926, %v1945
      %v1967 = vmax.f32 %v1927, %v1947
      %v1968 = vmax.f32 %v1928, %v1949
      %v1969 = vmax.f32 %v1929, %v1951
      %v1970 = vmax.f32 %v1930, %v1953
      %v1971 = vmax.f32 %v1931, %v1955
      %1980 = vrot.lane.b32.xlu0 %v1964, 126
      %v1981 = vpop.permute.xlu0 %1980
      %1982 = vrot.lane.b32.xlu0 %v1965, 126
      %v1983 = vpop.permute.xlu0 %1982
      %1984 = vrot.lane.b32.xlu0 %v1966, 126
      %v1985 = vpop.permute.xlu0 %1984
      %1986 = vrot.lane.b32.xlu0 %v1967, 126
      %v1987 = vpop.permute.xlu0 %1986
      %1988 = vrot.lane.b32.xlu0 %v1968, 126
      %v1989 = vpop.permute.xlu0 %1988
      %1990 = vrot.lane.b32.xlu0 %v1969, 126
      %v1991 = vpop.permute.xlu0 %1990
      %1992 = vrot.lane.b32.xlu0 %v1970, 126
      %v1993 = vpop.permute.xlu0 %1992
      %1994 = vrot.lane.b32.xlu0 %v1971, 126
      %v1995 = vpop.permute.xlu0 %1994
      %v2004 = vmax.f32 %v1964, %v1981
      %v2005 = vmax.f32 %v1965, %v1983
      %v2006 = vmax.f32 %v1966, %v1985
      %v2007 = vmax.f32 %v1967, %v1987
      %v2008 = vmax.f32 %v1968, %v1989
      %v2009 = vmax.f32 %v1969, %v1991
      %v2010 = vmax.f32 %v1970, %v1993
      %v2011 = vmax.f32 %v1971, %v1995
      %v2012 = vsub.f32 %v1924, %v2004
      %v2013 = vsub.f32 %v1925, %v2005
      %v2014 = vsub.f32 %v1926, %v2006
      %v2015 = vsub.f32 %v1927, %v2007
      %v2016 = vsub.f32 %v1928, %v2008
      %v2017 = vsub.f32 %v1929, %v2009
      %v2018 = vsub.f32 %v1930, %v2010
      %v2019 = vsub.f32 %v1931, %v2011
      %v2020 = vmul.f32 %v2012, 1.442695
      %v2021 = vpow.pop %v2020
      %v2022 = vmul.f32 %v2013, 1.442695
      %v2023 = vpow.pop %v2022
      %v2024 = vmul.f32 %v2014, 1.442695
      %v2025 = vpow.pop %v2024
      %v2026 = vmul.f32 %v2015, 1.442695
      %v2027 = vpow.pop %v2026
      %v2028 = vmul.f32 %v2016, 1.442695
      %v2029 = vpow.pop %v2028
      %v2030 = vmul.f32 %v2017, 1.442695
      %v2031 = vpow.pop %v2030
      %v2032 = vmul.f32 %v2018, 1.442695
      %v2033 = vpow.pop %v2032
      %v2034 = vmul.f32 %v2019, 1.442695
      %v2035 = vpow.pop %v2034
      %2044 = vrot.lane.b32.xlu0 %v2004, 1
      %v2045 = vpop.permute.xlu0 %2044
      %2046 = vrot.lane.b32.xlu0 %v2005, 1
      %v2047 = vpop.permute.xlu0 %2046
      %2048 = vrot.lane.b32.xlu0 %v2006, 1
      %v2049 = vpop.permute.xlu0 %2048
      %2050 = vrot.lane.b32.xlu0 %v2007, 1
      %v2051 = vpop.permute.xlu0 %2050
      %2052 = vrot.lane.b32.xlu0 %v2008, 1
      %v2053 = vpop.permute.xlu0 %2052
      %2054 = vrot.lane.b32.xlu0 %v2009, 1
      %v2055 = vpop.permute.xlu0 %2054
      %2056 = vrot.lane.b32.xlu0 %v2010, 1
      %v2057 = vpop.permute.xlu0 %2056
      %2058 = vrot.lane.b32.xlu0 %v2011, 1
      %v2059 = vpop.permute.xlu0 %2058
      %v2068 = vsub.f32 %v1924, %v2045
      %v2069 = vsub.f32 %v1925, %v2047
      %v2070 = vsub.f32 %v1926, %v2049
      %v2071 = vsub.f32 %v1927, %v2051
      %v2072 = vsub.f32 %v1928, %v2053
      %v2073 = vsub.f32 %v1929, %v2055
      %v2074 = vsub.f32 %v1930, %v2057
      %v2075 = vsub.f32 %v1931, %v2059
      %v2076 = vmul.f32 %v2068, 1.442695
      %v2077 = vpow.pop %v2076
      %v2078 = vmul.f32 %v2069, 1.442695
      %v2079 = vpow.pop %v2078
      %v2080 = vmul.f32 %v2070, 1.442695
      %v2081 = vpow.pop %v2080
      %v2082 = vmul.f32 %v2071, 1.442695
      %v2083 = vpow.pop %v2082
      %v2084 = vmul.f32 %v2072, 1.442695
      %v2085 = vpow.pop %v2084
      %v2086 = vmul.f32 %v2073, 1.442695
      %v2087 = vpow.pop %v2086
      %v2088 = vmul.f32 %v2074, 1.442695
      %v2089 = vpow.pop %v2088
      %v2090 = vmul.f32 %v2075, 1.442695
      %v2091 = vpow.pop %v2090
      %2092 = vrot.lane.b32.xlu0 %v2004, 2
      %v2093 = vpop.permute.xlu0 %2092
      %2094 = vrot.lane.b32.xlu0 %v2005, 2
      %v2095 = vpop.permute.xlu0 %2094
      %2096 = vrot.lane.b32.xlu0 %v2006, 2
      %v2097 = vpop.permute.xlu0 %2096
      %2098 = vrot.lane.b32.xlu0 %v2007, 2
      %v2099 = vpop.permute.xlu0 %2098
      %2100 = vrot.lane.b32.xlu0 %v2008, 2
      %v2101 = vpop.permute.xlu0 %2100
      %2102 = vrot.lane.b32.xlu0 %v2009, 2
      %v2103 = vpop.permute.xlu0 %2102
      %2104 = vrot.lane.b32.xlu0 %v2010, 2
      %v2105 = vpop.permute.xlu0 %2104
      %2106 = vrot.lane.b32.xlu0 %v2011, 2
      %v2107 = vpop.permute.xlu0 %2106
      %v2116 = vsub.f32 %v1924, %v2093
      %v2117 = vsub.f32 %v1925, %v2095
      %v2118 = vsub.f32 %v1926, %v2097
      %v2119 = vsub.f32 %v1927, %v2099
      %v2120 = vsub.f32 %v1928, %v2101
      %v2121 = vsub.f32 %v1929, %v2103
      %v2122 = vsub.f32 %v1930, %v2105
      %v2123 = vsub.f32 %v1931, %v2107
      %v2124 = vmul.f32 %v2116, 1.442695
      %v2125 = vpow.pop %v2124
      %v2126 = vmul.f32 %v2117, 1.442695
      %v2127 = vpow.pop %v2126
      %v2128 = vmul.f32 %v2118, 1.442695
      %v2129 = vpow.pop %v2128
      %v2130 = vmul.f32 %v2119, 1.442695
      %v2131 = vpow.pop %v2130
      %v2132 = vmul.f32 %v2120, 1.442695
      %v2133 = vpow.pop %v2132
      %v2134 = vmul.f32 %v2121, 1.442695
      %v2135 = vpow.pop %v2134
      %v2136 = vmul.f32 %v2122, 1.442695
      %v2137 = vpow.pop %v2136
      %v2138 = vmul.f32 %v2123, 1.442695
      %v2139 = vpow.pop %v2138
      %2140 = vrot.lane.b32.xlu0 %v2004, 3
      %v2141 = vpop.permute.xlu0 %2140
      %2142 = vrot.lane.b32.xlu0 %v2005, 3
      %v2143 = vpop.permute.xlu0 %2142
      %2144 = vrot.lane.b32.xlu0 %v2006, 3
      %v2145 = vpop.permute.xlu0 %2144
      %2146 = vrot.lane.b32.xlu0 %v2007, 3
      %v2147 = vpop.permute.xlu0 %2146
      %2148 = vrot.lane.b32.xlu0 %v2008, 3
      %v2149 = vpop.permute.xlu0 %2148
      %2150 = vrot.lane.b32.xlu0 %v2009, 3
      %v2151 = vpop.permute.xlu0 %2150
      %2152 = vrot.lane.b32.xlu0 %v2010, 3
      %v2153 = vpop.permute.xlu0 %2152
      %2154 = vrot.lane.b32.xlu0 %v2011, 3
      %v2155 = vpop.permute.xlu0 %2154
      %v2164 = vsub.f32 %v1924, %v2141
      %v2165 = vsub.f32 %v1925, %v2143
      %v2166 = vsub.f32 %v1926, %v2145
      %v2167 = vsub.f32 %v1927, %v2147
      %v2168 = vsub.f32 %v1928, %v2149
      %v2169 = vsub.f32 %v1929, %v2151
      %v2170 = vsub.f32 %v1930, %v2153
      %v2171 = vsub.f32 %v1931, %v2155
      %v2172 = vmul.f32 %v2164, 1.442695
      %v2173 = vpow.pop %v2172
      %v2174 = vmul.f32 %v2165, 1.442695
      %v2175 = vpow.pop %v2174
      %v2176 = vmul.f32 %v2166, 1.442695
      %v2177 = vpow.pop %v2176
      %v2178 = vmul.f32 %v2167, 1.442695
      %v2179 = vpow.pop %v2178
      %v2180 = vmul.f32 %v2168, 1.442695
      %v2181 = vpow.pop %v2180
      %v2182 = vmul.f32 %v2169, 1.442695
      %v2183 = vpow.pop %v2182
      %v2184 = vmul.f32 %v2170, 1.442695
      %v2185 = vpow.pop %v2184
      %v2186 = vmul.f32 %v2171, 1.442695
      %v2187 = vpow.pop %v2186
      %2196 = vrot.lane.b32.xlu0 %v2077, 127
      %v2197 = vpop.permute.xlu0 %2196
      %2198 = vrot.lane.b32.xlu0 %v2079, 127
      %v2199 = vpop.permute.xlu0 %2198
      %2200 = vrot.lane.b32.xlu0 %v2081, 127
      %v2201 = vpop.permute.xlu0 %2200
      %2202 = vrot.lane.b32.xlu0 %v2083, 127
      %v2203 = vpop.permute.xlu0 %2202
      %2204 = vrot.lane.b32.xlu0 %v2085, 127
      %v2205 = vpop.permute.xlu0 %2204
      %2206 = vrot.lane.b32.xlu0 %v2087, 127
      %v2207 = vpop.permute.xlu0 %2206
      %2208 = vrot.lane.b32.xlu0 %v2089, 127
      %v2209 = vpop.permute.xlu0 %2208
      %2210 = vrot.lane.b32.xlu0 %v2091, 127
      %v2211 = vpop.permute.xlu0 %2210
      %v2220 = vadd.f32 %v2021, %v2197
      %v2221 = vadd.f32 %v2023, %v2199
      %v2222 = vadd.f32 %v2025, %v2201
      %v2223 = vadd.f32 %v2027, %v2203
      %v2224 = vadd.f32 %v2029, %v2205
      %v2225 = vadd.f32 %v2031, %v2207
      %v2226 = vadd.f32 %v2033, %v2209
      %v2227 = vadd.f32 %v2035, %v2211
      %2236 = vrot.lane.b32.xlu0 %v2125, 126
      %v2237 = vpop.permute.xlu0 %2236
      %2238 = vrot.lane.b32.xlu0 %v2127, 126
      %v2239 = vpop.permute.xlu0 %2238
      %2240 = vrot.lane.b32.xlu0 %v2129, 126
      %v2241 = vpop.permute.xlu0 %2240
      %2242 = vrot.lane.b32.xlu0 %v2131, 126
      %v2243 = vpop.permute.xlu0 %2242
      %2244 = vrot.lane.b32.xlu0 %v2133, 126
      %v2245 = vpop.permute.xlu0 %2244
      %2246 = vrot.lane.b32.xlu0 %v2135, 126
      %v2247 = vpop.permute.xlu0 %2246
      %2248 = vrot.lane.b32.xlu0 %v2137, 126
      %v2249 = vpop.permute.xlu0 %2248
      %2250 = vrot.lane.b32.xlu0 %v2139, 126
      %v2251 = vpop.permute.xlu0 %2250
      %v2260 = vadd.f32 %v2220, %v2237
      %v2261 = vadd.f32 %v2221, %v2239
      %v2262 = vadd.f32 %v2222, %v2241
      %v2263 = vadd.f32 %v2223, %v2243
      %v2264 = vadd.f32 %v2224, %v2245
      %v2265 = vadd.f32 %v2225, %v2247
      %v2266 = vadd.f32 %v2226, %v2249
      %v2267 = vadd.f32 %v2227, %v2251
      %2276 = vrot.lane.b32.xlu0 %v2173, 125
      %v2277 = vpop.permute.xlu0 %2276
      %2278 = vrot.lane.b32.xlu0 %v2175, 125
      %v2279 = vpop.permute.xlu0 %2278
      %2280 = vrot.lane.b32.xlu0 %v2177, 125
      %v2281 = vpop.permute.xlu0 %2280
      %2282 = vrot.lane.b32.xlu0 %v2179, 125
      %v2283 = vpop.permute.xlu0 %2282
      %2284 = vrot.lane.b32.xlu0 %v2181, 125
      %v2285 = vpop.permute.xlu0 %2284
      %2286 = vrot.lane.b32.xlu0 %v2183, 125
      %v2287 = vpop.permute.xlu0 %2286
      %2288 = vrot.lane.b32.xlu0 %v2185, 125
      %v2289 = vpop.permute.xlu0 %2288
      %2290 = vrot.lane.b32.xlu0 %v2187, 125
      %v2291 = vpop.permute.xlu0 %2290
      %v2300 = vadd.f32 %v2260, %v2277
      %v2301 = vadd.f32 %v2261, %v2279
      %v2302 = vadd.f32 %v2262, %v2281
      %v2303 = vadd.f32 %v2263, %v2283
      %v2304 = vadd.f32 %v2264, %v2285
      %v2305 = vadd.f32 %v2265, %v2287
      %v2306 = vadd.f32 %v2266, %v2289
      %v2307 = vadd.f32 %v2267, %v2291
      %v2308 = vrcp.pop %v2300
      %v2309 = vmul.f32 1.0, %v2308
      %v2310 = vrcp.pop %v2301
      %v2311 = vmul.f32 1.0, %v2310
      %v2312 = vrcp.pop %v2302
      %v2313 = vmul.f32 1.0, %v2312
      %v2314 = vrcp.pop %v2303
      %v2315 = vmul.f32 1.0, %v2314
      %v2316 = vrcp.pop %v2304
      %v2317 = vmul.f32 1.0, %v2316
      %v2318 = vrcp.pop %v2305
      %v2319 = vmul.f32 1.0, %v2318
      %v2320 = vrcp.pop %v2306
      %v2321 = vmul.f32 1.0, %v2320
      %v2322 = vrcp.pop %v2307
      %v2323 = vmul.f32 1.0, %v2322
      %v2324 = vmul.f32 %v2021, %v2309
      %v2325 = vmul.f32 %v2023, %v2311
      %v2326 = vmul.f32 %v2025, %v2313
      %v2327 = vmul.f32 %v2027, %v2315
      %v2328 = vmul.f32 %v2029, %v2317
      %v2329 = vmul.f32 %v2031, %v2319
      %v2330 = vmul.f32 %v2033, %v2321
      %v2331 = vmul.f32 %v2035, %v2323
      %2333 = vset.pattern.permute.xlu0 32
      %2334 = vperm.xlu0 %2333, %v2324
      %v2335 = vpop.permute.xlu0 %2334
      %2338 = vset.pattern.permute.xlu0 32
      %2339 = vperm.xlu0 %2338, %v2325
      %v2340 = vpop.permute.xlu0 %2339
      %2343 = vset.pattern.permute.xlu0 32
      %2344 = vperm.xlu0 %2343, %v2326
      %v2345 = vpop.permute.xlu0 %2344
      %2348 = vset.pattern.permute.xlu0 32
      %2349 = vperm.xlu0 %2348, %v2327
      %v2350 = vpop.permute.xlu0 %2349
      %2353 = vset.pattern.permute.xlu0 32
      %2354 = vperm.xlu0 %2353, %v2328
      %v2355 = vpop.permute.xlu0 %2354
      %2358 = vset.pattern.permute.xlu0 32
      %2359 = vperm.xlu0 %2358, %v2329
      %v2360 = vpop.permute.xlu0 %2359
      %2363 = vset.pattern.permute.xlu0 32
      %2364 = vperm.xlu0 %2363, %v2330
      %v2365 = vpop.permute.xlu0 %2364
      %2368 = vset.pattern.permute.xlu0 32
      %2369 = vperm.xlu0 %2368, %v2331
      %v2370 = vpop.permute.xlu0 %2369
      %v2372 = vmul.f32 %v1916, %v2335
      %v2373 = vmul.f32 %v1917, %v2340
      %v2374 = vmul.f32 %v1918, %v2345
      %v2375 = vmul.f32 %v1919, %v2350
      %v2376 = vmul.f32 %v1920, %v2355
      %v2377 = vmul.f32 %v1921, %v2360
      %v2378 = vmul.f32 %v1922, %v2365
      %v2379 = vmul.f32 %v1923, %v2370
      %2388 = vrot.lane.b32.xlu0 %v2309, 1
      %v2389 = vpop.permute.xlu0 %2388
      %2390 = vrot.lane.b32.xlu0 %v2311, 1
      %v2391 = vpop.permute.xlu0 %2390
      %2392 = vrot.lane.b32.xlu0 %v2313, 1
      %v2393 = vpop.permute.xlu0 %2392
      %2394 = vrot.lane.b32.xlu0 %v2315, 1
      %v2395 = vpop.permute.xlu0 %2394
      %2396 = vrot.lane.b32.xlu0 %v2317, 1
      %v2397 = vpop.permute.xlu0 %2396
      %2398 = vrot.lane.b32.xlu0 %v2319, 1
      %v2399 = vpop.permute.xlu0 %2398
      %2400 = vrot.lane.b32.xlu0 %v2321, 1
      %v2401 = vpop.permute.xlu0 %2400
      %2402 = vrot.lane.b32.xlu0 %v2323, 1
      %v2403 = vpop.permute.xlu0 %2402
      %v2412 = vmul.f32 %v2077, %v2389
      %v2413 = vmul.f32 %v2079, %v2391
      %v2414 = vmul.f32 %v2081, %v2393
      %v2415 = vmul.f32 %v2083, %v2395
      %v2416 = vmul.f32 %v2085, %v2397
      %v2417 = vmul.f32 %v2087, %v2399
      %v2418 = vmul.f32 %v2089, %v2401
      %v2419 = vmul.f32 %v2091, %v2403
      %2421 = vset.pattern.permute.xlu0 33
      %2422 = vperm.xlu0 %2421, %v2412
      %v2423 = vpop.permute.xlu0 %2422
      %2426 = vset.pattern.permute.xlu0 33
      %2427 = vperm.xlu0 %2426, %v2413
      %v2428 = vpop.permute.xlu0 %2427
      %2431 = vset.pattern.permute.xlu0 33
      %2432 = vperm.xlu0 %2431, %v2414
      %v2433 = vpop.permute.xlu0 %2432
      %2436 = vset.pattern.permute.xlu0 33
      %2437 = vperm.xlu0 %2436, %v2415
      %v2438 = vpop.permute.xlu0 %2437
      %2441 = vset.pattern.permute.xlu0 33
      %2442 = vperm.xlu0 %2441, %v2416
      %v2443 = vpop.permute.xlu0 %2442
      %2446 = vset.pattern.permute.xlu0 33
      %2447 = vperm.xlu0 %2446, %v2417
      %v2448 = vpop.permute.xlu0 %2447
      %2451 = vset.pattern.permute.xlu0 33
      %2452 = vperm.xlu0 %2451, %v2418
      %v2453 = vpop.permute.xlu0 %2452
      %2456 = vset.pattern.permute.xlu0 33
      %2457 = vperm.xlu0 %2456, %v2419
      %v2458 = vpop.permute.xlu0 %2457
      %v2460 = vmul.f32 %v1916, %v2423
      %v2461 = vmul.f32 %v1917, %v2428
      %v2462 = vmul.f32 %v1918, %v2433
      %v2463 = vmul.f32 %v1919, %v2438
      %v2464 = vmul.f32 %v1920, %v2443
      %v2465 = vmul.f32 %v1921, %v2448
      %v2466 = vmul.f32 %v1922, %v2453
      %v2467 = vmul.f32 %v1923, %v2458
      %2476 = vrot.lane.b32.xlu0 %v2460, 120
      %v2477 = vpop.permute.xlu0 %2476
      %2478 = vrot.lane.b32.xlu0 %v2461, 120
      %v2479 = vpop.permute.xlu0 %2478
      %2480 = vrot.lane.b32.xlu0 %v2462, 120
      %v2481 = vpop.permute.xlu0 %2480
      %2482 = vrot.lane.b32.xlu0 %v2463, 120
      %v2483 = vpop.permute.xlu0 %2482
      %2484 = vrot.lane.b32.xlu0 %v2464, 120
      %v2485 = vpop.permute.xlu0 %2484
      %2486 = vrot.lane.b32.xlu0 %v2465, 120
      %v2487 = vpop.permute.xlu0 %2486
      %2488 = vrot.lane.b32.xlu0 %v2466, 120
      %v2489 = vpop.permute.xlu0 %2488
      %2490 = vrot.lane.b32.xlu0 %v2467, 120
      %v2491 = vpop.permute.xlu0 %2490
      %v2500 = vadd.f32 %v2372, %v2477
      %v2501 = vadd.f32 %v2373, %v2479
      %v2502 = vadd.f32 %v2374, %v2481
      %v2503 = vadd.f32 %v2375, %v2483
      %v2504 = vadd.f32 %v2376, %v2485
      %v2505 = vadd.f32 %v2377, %v2487
      %v2506 = vadd.f32 %v2378, %v2489
      %v2507 = vadd.f32 %v2379, %v2491
      %2508 = vrot.lane.b32.xlu0 %v2309, 2
      %v2509 = vpop.permute.xlu0 %2508
      %2510 = vrot.lane.b32.xlu0 %v2311, 2
      %v2511 = vpop.permute.xlu0 %2510
      %2512 = vrot.lane.b32.xlu0 %v2313, 2
      %v2513 = vpop.permute.xlu0 %2512
      %2514 = vrot.lane.b32.xlu0 %v2315, 2
      %v2515 = vpop.permute.xlu0 %2514
      %2516 = vrot.lane.b32.xlu0 %v2317, 2
      %v2517 = vpop.permute.xlu0 %2516
      %2518 = vrot.lane.b32.xlu0 %v2319, 2
      %v2519 = vpop.permute.xlu0 %2518
      %2520 = vrot.lane.b32.xlu0 %v2321, 2
      %v2521 = vpop.permute.xlu0 %2520
      %2522 = vrot.lane.b32.xlu0 %v2323, 2
      %v2523 = vpop.permute.xlu0 %2522
      %v2532 = vmul.f32 %v2125, %v2509
      %v2533 = vmul.f32 %v2127, %v2511
      %v2534 = vmul.f32 %v2129, %v2513
      %v2535 = vmul.f32 %v2131, %v2515
      %v2536 = vmul.f32 %v2133, %v2517
      %v2537 = vmul.f32 %v2135, %v2519
      %v2538 = vmul.f32 %v2137, %v2521
      %v2539 = vmul.f32 %v2139, %v2523
      %2541 = vset.pattern.permute.xlu0 34
      %2542 = vperm.xlu0 %2541, %v2532
      %v2543 = vpop.permute.xlu0 %2542
      %2546 = vset.pattern.permute.xlu0 34
      %2547 = vperm.xlu0 %2546, %v2533
      %v2548 = vpop.permute.xlu0 %2547
      %2551 = vset.pattern.permute.xlu0 34
      %2552 = vperm.xlu0 %2551, %v2534
      %v2553 = vpop.permute.xlu0 %2552
      %2556 = vset.pattern.permute.xlu0 34
      %2557 = vperm.xlu0 %2556, %v2535
      %v2558 = vpop.permute.xlu0 %2557
      %2561 = vset.pattern.permute.xlu0 34
      %2562 = vperm.xlu0 %2561, %v2536
      %v2563 = vpop.permute.xlu0 %2562
      %2566 = vset.pattern.permute.xlu0 34
      %2567 = vperm.xlu0 %2566, %v2537
      %v2568 = vpop.permute.xlu0 %2567
      %2571 = vset.pattern.permute.xlu0 34
      %2572 = vperm.xlu0 %2571, %v2538
      %v2573 = vpop.permute.xlu0 %2572
      %2576 = vset.pattern.permute.xlu0 34
      %2577 = vperm.xlu0 %2576, %v2539
      %v2578 = vpop.permute.xlu0 %2577
      %v2580 = vmul.f32 %v1916, %v2543
      %v2581 = vmul.f32 %v1917, %v2548
      %v2582 = vmul.f32 %v1918, %v2553
      %v2583 = vmul.f32 %v1919, %v2558
      %v2584 = vmul.f32 %v1920, %v2563
      %v2585 = vmul.f32 %v1921, %v2568
      %v2586 = vmul.f32 %v1922, %v2573
      %v2587 = vmul.f32 %v1923, %v2578
      %2596 = vrot.lane.b32.xlu0 %v2580, 112
      %v2597 = vpop.permute.xlu0 %2596
      %2598 = vrot.lane.b32.xlu0 %v2581, 112
      %v2599 = vpop.permute.xlu0 %2598
      %2600 = vrot.lane.b32.xlu0 %v2582, 112
      %v2601 = vpop.permute.xlu0 %2600
      %2602 = vrot.lane.b32.xlu0 %v2583, 112
      %v2603 = vpop.permute.xlu0 %2602
      %2604 = vrot.lane.b32.xlu0 %v2584, 112
      %v2605 = vpop.permute.xlu0 %2604
      %2606 = vrot.lane.b32.xlu0 %v2585, 112
      %v2607 = vpop.permute.xlu0 %2606
      %2608 = vrot.lane.b32.xlu0 %v2586, 112
      %v2609 = vpop.permute.xlu0 %2608
      %2610 = vrot.lane.b32.xlu0 %v2587, 112
      %v2611 = vpop.permute.xlu0 %2610
      %v2620 = vadd.f32 %v2500, %v2597
      %v2621 = vadd.f32 %v2501, %v2599
      %v2622 = vadd.f32 %v2502, %v2601
      %v2623 = vadd.f32 %v2503, %v2603
      %v2624 = vadd.f32 %v2504, %v2605
      %v2625 = vadd.f32 %v2505, %v2607
      %v2626 = vadd.f32 %v2506, %v2609
      %v2627 = vadd.f32 %v2507, %v2611
      %2628 = vrot.lane.b32.xlu0 %v2309, 3
      %v2629 = vpop.permute.xlu0 %2628
      %2630 = vrot.lane.b32.xlu0 %v2311, 3
      %v2631 = vpop.permute.xlu0 %2630
      %2632 = vrot.lane.b32.xlu0 %v2313, 3
      %v2633 = vpop.permute.xlu0 %2632
      %2634 = vrot.lane.b32.xlu0 %v2315, 3
      %v2635 = vpop.permute.xlu0 %2634
      %2636 = vrot.lane.b32.xlu0 %v2317, 3
      %v2637 = vpop.permute.xlu0 %2636
      %2638 = vrot.lane.b32.xlu0 %v2319, 3
      %v2639 = vpop.permute.xlu0 %2638
      %2640 = vrot.lane.b32.xlu0 %v2321, 3
      %v2641 = vpop.permute.xlu0 %2640
      %2642 = vrot.lane.b32.xlu0 %v2323, 3
      %v2643 = vpop.permute.xlu0 %2642
      %v2652 = vmul.f32 %v2173, %v2629
      %v2653 = vmul.f32 %v2175, %v2631
      %v2654 = vmul.f32 %v2177, %v2633
      %v2655 = vmul.f32 %v2179, %v2635
      %v2656 = vmul.f32 %v2181, %v2637
      %v2657 = vmul.f32 %v2183, %v2639
      %v2658 = vmul.f32 %v2185, %v2641
      %v2659 = vmul.f32 %v2187, %v2643
      %2661 = vset.pattern.permute.xlu0 35
      %2662 = vperm.xlu0 %2661, %v2652
      %v2663 = vpop.permute.xlu0 %2662
      %2666 = vset.pattern.permute.xlu0 35
      %2667 = vperm.xlu0 %2666, %v2653
      %v2668 = vpop.permute.xlu0 %2667
      %2671 = vset.pattern.permute.xlu0 35
      %2672 = vperm.xlu0 %2671, %v2654
      %v2673 = vpop.permute.xlu0 %2672
      %2676 = vset.pattern.permute.xlu0 35
      %2677 = vperm.xlu0 %2676, %v2655
      %v2678 = vpop.permute.xlu0 %2677
      %2681 = vset.pattern.permute.xlu0 35
      %2682 = vperm.xlu0 %2681, %v2656
      %v2683 = vpop.permute.xlu0 %2682
      %2686 = vset.pattern.permute.xlu0 35
      %2687 = vperm.xlu0 %2686, %v2657
      %v2688 = vpop.permute.xlu0 %2687
      %2691 = vset.pattern.permute.xlu0 35
      %2692 = vperm.xlu0 %2691, %v2658
      %v2693 = vpop.permute.xlu0 %2692
      %2696 = vset.pattern.permute.xlu0 35
      %2697 = vperm.xlu0 %2696, %v2659
      %v2698 = vpop.permute.xlu0 %2697
      %v2700 = vmul.f32 %v1916, %v2663
      %v2701 = vmul.f32 %v1917, %v2668
      %v2702 = vmul.f32 %v1918, %v2673
      %v2703 = vmul.f32 %v1919, %v2678
      %v2704 = vmul.f32 %v1920, %v2683
      %v2705 = vmul.f32 %v1921, %v2688
      %v2706 = vmul.f32 %v1922, %v2693
      %v2707 = vmul.f32 %v1923, %v2698
      %2716 = vrot.lane.b32.xlu0 %v2700, 104
      %v2717 = vpop.permute.xlu0 %2716
      %2718 = vrot.lane.b32.xlu0 %v2701, 104
      %v2719 = vpop.permute.xlu0 %2718
      %2720 = vrot.lane.b32.xlu0 %v2702, 104
      %v2721 = vpop.permute.xlu0 %2720
      %2722 = vrot.lane.b32.xlu0 %v2703, 104
      %v2723 = vpop.permute.xlu0 %2722
      %2724 = vrot.lane.b32.xlu0 %v2704, 104
      %v2725 = vpop.permute.xlu0 %2724
      %2726 = vrot.lane.b32.xlu0 %v2705, 104
      %v2727 = vpop.permute.xlu0 %2726
      %2728 = vrot.lane.b32.xlu0 %v2706, 104
      %v2729 = vpop.permute.xlu0 %2728
      %2730 = vrot.lane.b32.xlu0 %v2707, 104
      %v2731 = vpop.permute.xlu0 %2730
      %v2740 = vadd.f32 %v2620, %v2717
      %v2741 = vadd.f32 %v2621, %v2719
      %v2742 = vadd.f32 %v2622, %v2721
      %v2743 = vadd.f32 %v2623, %v2723
      %v2744 = vadd.f32 %v2624, %v2725
      %v2745 = vadd.f32 %v2625, %v2727
      %v2746 = vadd.f32 %v2626, %v2729
      %v2747 = vadd.f32 %v2627, %v2731
      %v2748 = vld [vmem:[%s4] sm:$0xff]
      %v2750 = vsel %vm492, %v2740, 0
      %v2753 = vsel %vm492, %v2741, 0
      %v2756 = vsel %vm492, %v2742, 0
      %v2759 = vsel %vm492, %v2743, 0
      %v2762 = vsel %vm492, %v2744, 0
      %v2765 = vsel %vm492, %v2745, 0
      %v2768 = vsel %vm492, %v2746, 0
      %v2771 = vsel %vm492, %v2747, 0
      %2773 = vmatprep.subr.mxu0 0.0
      %2774 = vmatpush1.msra.mxu0 %v2748
      %2775 = vmatprep.subr.mxu0 0.0
      %2776 = vmatpush1.msra.mxu0 0.0
      %2777 = vmatprep.subr.mxu0 0.0
      %2778 = vmatpush1.msra.mxu0 0.0
      %2779 = vmatprep.subr.mxu0 0.0
      %2780 = vmatpush1.msra.mxu0 0.0
      %2781 = vmatprep.subr.mxu0 0.0
      %2782 = vmatpush1.msra.mxu0 0.0
      %2783 = vmatprep.subr.mxu0 0.0
      %2784 = vmatpush1.msra.mxu0 0.0
      %2785 = vmatprep.subr.mxu0 0.0
      %2786 = vmatpush1.msra.mxu0 0.0
      %2787 = vmatprep.subr.mxu0 0.0
      %2788 = vmatpush1.msra.mxu0 0.0
      %2789 = vmatprep.subr.mxu0 0.0
      %2790 = vmatpush1.msra.mxu0 0.0
      %2791 = vmatprep.subr.mxu0 0.0
      %2792 = vmatpush1.msra.mxu0 0.0
      %2793 = vmatprep.subr.mxu0 0.0
      %2794 = vmatpush1.msra.mxu0 0.0
      %2795 = vmatprep.subr.mxu0 0.0
      %2796 = vmatpush1.msra.mxu0 0.0
      %2797 = vmatprep.subr.mxu0 0.0
      %2798 = vmatpush1.msra.mxu0 0.0
      %2799 = vmatprep.subr.mxu0 0.0
      %2800 = vmatpush1.msra.mxu0 0.0
      %2801 = vmatprep.subr.mxu0 0.0
      %2802 = vmatpush1.msra.mxu0 0.0
      %2803 = vmatprep.subr.mxu0 0.0
      %2804 = vmatpush1.msra.mxu0 0.0
      %2805 = vmatprep.subr.mxu0 0.0
      %2806 = vmatpush1.msra.mxu0 0.0
      %2807 = vmatprep.subr.mxu0 0.0
      %2808 = vmatpush1.msra.mxu0 0.0
      %2809 = vmatprep.subr.mxu0 0.0
      %2810 = vmatpush1.msra.mxu0 0.0
      %2811 = vmatprep.subr.mxu0 0.0
      %2812 = vmatpush1.msra.mxu0 0.0
      %2813 = vmatprep.subr.mxu0 0.0
      %2814 = vmatpush1.msra.mxu0 0.0
      %2815 = vmatprep.subr.mxu0 0.0
      %2816 = vmatpush1.msra.mxu0 0.0
      %2817 = vmatprep.subr.mxu0 0.0
      %2818 = vmatpush1.msra.mxu0 0.0
      %2819 = vmatprep.subr.mxu0 0.0
      %2820 = vmatpush1.msra.mxu0 0.0
      %2821 = vmatprep.subr.mxu0 0.0
      %2822 = vmatpush1.msra.mxu0 0.0
      %2823 = vmatprep.subr.mxu0 0.0
      %2824 = vmatpush1.msra.mxu0 0.0
      %2825 = vmatprep.subr.mxu0 0.0
      %2826 = vmatpush1.msra.mxu0 0.0
      %2827 = vmatprep.subr.mxu0 0.0
      %2828 = vmatpush1.msra.mxu0 0.0
      %2829 = vmatprep.subr.mxu0 0.0
      %2830 = vmatpush1.msra.mxu0 0.0
      %2831 = vmatprep.subr.mxu0 0.0
      %2832 = vmatpush1.msra.mxu0 0.0
      %2833 = vmatprep.subr.mxu0 0.0
      %2834 = vmatpush1.msra.mxu0 0.0
      %2835 = vmatprep.subr.mxu0 0.0
      %2836 = vmatpush1.msra.mxu0 0.0
      %2837 = vmatprep.mubr.f32.mxu0 0.0
      %2838 = vmatmul.mubr.f32.gmra.mrb[0].mxu0 %v2750
      %v2839 = vpop.f32.mrb[0].mxu0
      %v2840 = vadd.f32 0.0, %v2839
      %v2841 = vpop.f32.mrb[0].mxu0
      %2842 = vmatprep.mubr.f32.mxu0 0.0
      %2843 = vmatmul.mubr.f32.gmra.mrb[0].mxu0 %v2753
      %v2844 = vpop.f32.mrb[0].mxu0
      %v2845 = vadd.f32 0.0, %v2844
      %v2846 = vpop.f32.mrb[0].mxu0
      %2847 = vmatprep.mubr.f32.mxu0 0.0
      %2848 = vmatmul.mubr.f32.gmra.mrb[0].mxu0 %v2756
      %v2849 = vpop.f32.mrb[0].mxu0
      %v2850 = vadd.f32 0.0, %v2849
      %v2851 = vpop.f32.mrb[0].mxu0
      %2852 = vmatprep.mubr.f32.mxu0 0.0
      %2853 = vmatmul.mubr.f32.gmra.mrb[0].mxu0 %v2759
      %v2854 = vpop.f32.mrb[0].mxu0
      %v2855 = vadd.f32 0.0, %v2854
      %v2856 = vpop.f32.mrb[0].mxu0
      %2857 = vmatprep.mubr.f32.mxu0 0.0
      %2858 = vmatmul.mubr.f32.gmra.mrb[0].mxu0 %v2762
      %v2859 = vpop.f32.mrb[0].mxu0
      %v2860 = vadd.f32 0.0, %v2859
      %v2861 = vpop.f32.mrb[0].mxu0
      %2862 = vmatprep.mubr.f32.mxu0 0.0
      %2863 = vmatmul.mubr.f32.gmra.mrb[0].mxu0 %v2765
      %v2864 = vpop.f32.mrb[0].mxu0
      %v2865 = vadd.f32 0.0, %v2864
      %v2866 = vpop.f32.mrb[0].mxu0
      %2867 = vmatprep.mubr.f32.mxu0 0.0
      %2868 = vmatmul.mubr.f32.gmra.mrb[0].mxu0 %v2768
      %v2869 = vpop.f32.mrb[0].mxu0
      %v2870 = vadd.f32 0.0, %v2869
      %v2871 = vpop.f32.mrb[0].mxu0
      %2872 = vmatprep.mubr.f32.mxu0 0.0
      %2873 = vmatmul.mubr.f32.gmra.mrb[0].mxu0 %v2771
      %v2874 = vpop.f32.mrb[0].mxu0
      %v2875 = vadd.f32 0.0, %v2874
      %v2876 = vpop.f32.mrb[0].mxu0
      %2877 = vdwg.mxu0
      %v2878 = vmul.f32 %v2840, 0.125
      %v2879 = vmul.f32 %v2845, 0.125
      %v2880 = vmul.f32 %v2850, 0.125
      %v2881 = vmul.f32 %v2855, 0.125
      %v2882 = vmul.f32 %v2860, 0.125
      %v2883 = vmul.f32 %v2865, 0.125
      %v2884 = vmul.f32 %v2870, 0.125
      %v2885 = vmul.f32 %v2875, 0.125
      %2886 = vst.msk [vmem:[%s224] sm:$0xff] %vm237, %v2878
      %2887 = vst.msk [vmem:[%s224 + $0x8] sm:$0xff] %vm237, %v2879
      %2888 = vst.msk [vmem:[%s224 + $0x10] sm:$0xff] %vm237, %v2880
      %2889 = vst.msk [vmem:[%s224 + $0x18] sm:$0xff] %vm237, %v2881
      %2890 = vst.msk [vmem:[%s224 + $0x20] sm:$0xff] %vm237, %v2882
      %2891 = vst.msk [vmem:[%s224 + $0x28] sm:$0xff] %vm237, %v2883
      %2892 = vst.msk [vmem:[%s224 + $0x30] sm:$0xff] %vm237, %v2884
      %2893 = vst.msk [vmem:[%s224 + $0x38] sm:$0xff] %vm237, %v2885
      %p2894 = scmp.lt.s32.totalorder %s16, 1
      %s2895 = scalar_select %p2894, %s16, 1
      %s2896 = smul.addr %s2895, 8
      %s2897 = smul.addr %s2896, 8
      %s2898 = scalar_lea.vmem %s5, %s2897
      // Predicated region
      $region41: #{convlora_forward.1} parent=39 // pred_check
        %p2899 = pneg %p144
      $region42: #{convlora_forward.1} parent=39 // pred_check_branch
        %2901 = sbr.rel (%p2899) target = $region44
      $region43: #{convlora_forward.1} parent=39 // pred_region
        _
      $region44: #{convlora_forward.1} parent=39 // pred_fallthru
        _
    $region40: #{convlora_forward.1} parent=5 // pred_fallthru
      _
    %p2902 = scmp.le.s32.totalorder 2, %s11
    // Predicated region
    $region45: #{convlora_forward.1} parent=5 // pred_check
      %p2903 = pneg %p2902
    $region46: #{convlora_forward.1} parent=5 // pred_check_branch
      %2905 = sbr.rel (%p2903) target = $region48
    $region47: #{convlora_forward.1} parent=5 // pred_region
      %s2906 = ssub.s32 %s11, 2
      // Predicated region
      $region49: #{convlora_forward.1} parent=47 // pred_check
        %p2907 = pneg %p150
      $region50: #{convlora_forward.1} parent=47 // pred_check_branch
        %2909 = sbr.rel (%p2907) target = $region52
      $region51: #{convlora_forward.1} parent=47 // pred_region
        %p2910 = scmp.lt.s32.totalorder %s17, 1
        %s2911 = scalar_select %p2910, %s17, 1
        %s2912 = smul.addr %s2911, 8
        %s2913 = smul.addr %s2912, 8
        %s2914 = scalar_lea.vmem %s5, %s2913
      $region52: #{convlora_forward.1} parent=47 // pred_fallthru
        _
    $region48: #{convlora_forward.1} parent=5 // pred_fallthru
      _
  $region6: #{convlora_forward.1} parent=0 // loop_footer
    %s15 = sadd.s32 1, %s11
  $region7: #{convlora_forward.1} parent=0 // loop_footer_branch
    %10 = sbr.rel target = $region3
  $region8: #{convlora_forward.1} parent=0 // loop_exit
    _

</llo_original>
